<compile_context>
chip_gen: v7x
topology: tpu7x:2x2x1
jax: 0.10.0
libtpu: 0.0.40
codegen_flags: <defaults>
</compile_context>

<pallas_src>
import functools
import math

import jax
import jax.numpy as jnp
from jax.experimental import pallas as pl
from jax.experimental.pallas import tpu as pltpu

PAD = 128    # lane width / padded feature dimension
HALF = 64    # lane split: decoder in [0,64), partial-domain head in [64,128)
NUM_W = 9    # packed 128x128 weight tiles
NUM_V = 17   # packed bias / BN-scale / BN-shift rows


# ------------------------------- fused kernel -------------------------------

def fused_forward_kernel(x_ref, w_hbm, v_ref, o_ref, w_vmem, w_sem, *, d0, num_w):
    """Entire CompleteModel forward on resident VMEM data.

    x_ref : (N, d0) f32 input (un-padded)
    w_hbm : (num_w, 128, 128) bf16 weight slab, left in HBM and streamed
            tiles: [0:3] encoder, [3:6] merged clf+domain head,
                   [6:9] merged decoder + partial-domain head
    v_ref : (17, 128) f32 bias / folded-BN scale / shift rows
    o_ref : (N, 128) output slab:
            cols [0:d0) reconstruct, d0 classOutput, d0+1 domainClfOutput,
            d0+2 partDmClf
    w_vmem: (num_w, 128, 128) bf16 VMEM scratch for streamed weight tiles
    w_sem : (num_w,) DMA semaphores
    """
    # Kick off every weight-tile DMA up front; waits are placed right before
    # each tile's matmul so HBM transfer overlaps the serial compute chain.
    for i in range(num_w):
        pltpu.make_async_copy(w_hbm.at[i], w_vmem.at[i], w_sem.at[i]).start()

    def wait_w(i):
        pltpu.make_async_copy(w_hbm.at[i], w_vmem.at[i], w_sem.at[i]).wait()

    def sig(z):
        return 1.0 / (1.0 + jnp.exp(-z))      # exact; divide rides the EUP

    def vrow(i):                               # (1, 128) bias/scale/shift row
        return v_ref[i:i + 1, :]

    def mm(h, wi):                             # wait-then-matmul on tile wi
        wait_w(wi)
        w = w_vmem[wi].astype(jnp.float32)
        return jnp.dot(h, w, preferred_element_type=jnp.float32)

    x = x_ref[...].astype(jnp.float32)         # (N, d0)

    # ---- stack_encoder: 3 x (Linear -> Sigmoid) ----
    wait_w(0)
    w0 = w_vmem[0, :d0, :].astype(jnp.float32)           # only the live rows
    h = sig(jnp.dot(x, w0, preferred_element_type=jnp.float32) + vrow(0))
    h = sig(mm(h, 1) + vrow(1))
    hid = sig(mm(h, 2) + vrow(2))
    # hidden_feature in lanes [0,hid_dim); padded lanes hold 0.5 junk but every
    # downstream weight tile has zero rows there, so nothing contaminates.

    # ---- merged classifier + domain head (both consume hid; one MXU push/layer) ----
    a = jnp.maximum(mm(hid, 3) + vrow(3), 0.0) * vrow(4) + vrow(5)
    a = jnp.maximum(mm(a, 4) + vrow(6), 0.0) * vrow(7) + vrow(8)
    heads = sig(mm(a, 5) + vrow(9))            # lane d0 = classOutput, d0+1 = domainClfOutput

    cls = heads[:, d0:d0 + 1]                  # (N, 1) classOutput column

    # ---- merged decoder (lanes [0,64)) + partial-domain head (lanes [64,128)) ----
    # partDm feature = hid * cls; by linearity (hid*cls) @ W == cls * (hid @ W),
    # so one matmul serves both branches and the cls factor is a lane-masked mul.
    col = jax.lax.broadcasted_iota(jnp.int32, o_ref.shape, 1)
    left = col < HALF
    lane_scale = jnp.where(left, 1.0, cls)

    z = mm(hid, 6) * lane_scale + vrow(10)
    g = jnp.where(left, sig(z), jnp.maximum(z, 0.0) * vrow(11) + vrow(12))
    z = mm(g, 7) + vrow(13)
    g = jnp.where(left, sig(z), jnp.maximum(z, 0.0) * vrow(14) + vrow(15))
    fin = sig(mm(g, 8) + vrow(16))             # lanes [0,d0) reconstruct, lane d0+2 partDmClf

    # ---- splice classOutput / domainClfOutput into lanes d0, d0+1 ----
    mask = (col == d0) | (col == d0 + 1)
    o_ref[...] = jnp.where(mask, heads, fin)


# ---------------------------- parameter handling ----------------------------

def _init_linear(key, fan_in, fan_out):
    """PyTorch nn.Linear default init; weight stored as (in, out).

    Weights are rounded to bf16 (the kernel streams them as bf16) so the
    pure-JAX reference and the kernel share identical effective parameters.
    """
    kw, kb = jax.random.split(key)
    bound = 1.0 / math.sqrt(float(fan_in))
    w = jax.random.uniform(kw, (fan_in, fan_out), jnp.float32, -bound, bound)
    w = w.astype(jnp.bfloat16).astype(jnp.float32)
    b = jax.random.uniform(kb, (fan_out,), jnp.float32, -bound, bound)
    return w, b


def _init_bn(key, dim, eps=1e-5):
    """BatchNorm1d (eval mode) folded into per-feature scale/shift."""
    kg, kb, km, kv = jax.random.split(key, 4)
    gamma = 1.0 + 0.1 * jax.random.normal(kg, (dim,), jnp.float32)
    beta = 0.1 * jax.random.normal(kb, (dim,), jnp.float32)
    r_mean = 0.1 * jax.random.normal(km, (dim,), jnp.float32)
    r_var = 1.0 + 0.1 * jax.random.uniform(kv, (dim,), jnp.float32)
    scale = gamma / jnp.sqrt(r_var + eps)
    shift = beta - r_mean * scale
    return scale, shift


def _init_head(key, hidden_dim, mid1=64, mid2=32):
    ks = jax.random.split(key, 5)
    w1, b1 = _init_linear(ks[0], hidden_dim, mid1)
    s1, t1 = _init_bn(ks[1], mid1)
    w2, b2 = _init_linear(ks[2], mid1, mid2)
    s2, t2 = _init_bn(ks[3], mid2)
    w3, b3 = _init_linear(ks[4], mid2, 1)
    return (w1, b1, s1, t1, w2, b2, s2, t2, w3, b3)


def init_raw_params(key, layer_list, hidden_dim):
    assert layer_list[-1] == hidden_dim
    keys = jax.random.split(key, 9)
    enc = [_init_linear(keys[i], layer_list[i], layer_list[i + 1]) for i in range(3)]
    rev = list(reversed(layer_list))
    dec = [_init_linear(keys[3 + i], rev[i], rev[i + 1]) for i in range(3)]
    return {
        "enc": enc,
        "dec": dec,
        "clf": _init_head(keys[6], hidden_dim),
        "dm": _init_head(keys[7], hidden_dim),
        "dm_o": _init_head(keys[8], hidden_dim),
    }


def pack_params(raw):
    """Pack all parameters into one bf16 weight slab + one f32 bias/BN slab."""
    enc, dec = raw["enc"], raw["dec"]
    cw1, cb1, cs1, ct1, cw2, cb2, cs2, ct2, cw3, cb3 = raw["clf"]
    dw1, db1, ds1, dt1, dw2, db2, ds2, dt2, dw3, db3 = raw["dm"]
    ow1, ob1, os1, ot1, ow2, ob2, os2, ot2, ow3, ob3 = raw["dm_o"]

    d0 = enc[0][0].shape[0]                 # input dim == decoder output dim
    hid = enc[2][0].shape[1]
    m1, m2 = cw1.shape[1], cw2.shape[1]     # head widths (64, 32)

    # lane-layout feasibility for the packed/fused tiles
    assert d0 + 3 <= PAD
    assert hid <= HALF
    assert m1 <= HALF and m2 <= HALF and 2 * m1 <= PAD and 2 * m2 <= PAD
    assert dec[0][0].shape[1] <= HALF and dec[1][0].shape[1] <= HALF

    def zero():
        return jnp.zeros((PAD, PAD), jnp.float32)

    def place(t, w, r0, c0):
        return t.at[r0:r0 + w.shape[0], c0:c0 + w.shape[1]].set(w)

    (e0w, e0b), (e1w, e1b), (e2w, e2b) = dec

    w_tiles = [
        place(zero(), enc[0][0], 0, 0),                       # 0 encoder 1
        place(zero(), enc[1][0], 0, 0),                       # 1 encoder 2
        place(zero(), enc[2][0], 0, 0),                       # 2 encoder 3
        place(place(zero(), cw1, 0, 0), dw1, 0, m1),          # 3 clf|dm layer 1
        place(place(zero(), cw2, 0, 0), dw2, m1, m2),         # 4 clf|dm layer 2
        place(place(zero(), cw3, 0, d0), dw3, m2, d0 + 1),    # 5 clf|dm layer 3 -> lanes d0, d0+1
        place(place(zero(), e0w, 0, 0), ow1, 0, HALF),        # 6 dec1 | partDm 1
        place(place(zero(), e1w, 0, 0), ow2, HALF, HALF),     # 7 dec2 | partDm 2
        place(place(zero(), e2w, 0, 0), ow3, HALF, d0 + 2),   # 8 dec3 | partDm 3 -> lane d0+2
    ]
    w_slab = jnp.stack(w_tiles).astype(jnp.bfloat16)          # (9, 128, 128) bf16

    def row(pairs):
        r = jnp.zeros((PAD,), jnp.float32)
        for v, off in pairs:
            r = r.at[off:off + v.shape[0]].set(v)
        return r

    v_rows = [
        row([(enc[0][1], 0)]),                 # 0  encoder bias 1
        row([(enc[1][1], 0)]),                 # 1  encoder bias 2
        row([(enc[2][1], 0)]),                 # 2  encoder bias 3
        row([(cb1, 0), (db1, m1)]),            # 3  head-1 bias
        row([(cs1, 0), (ds1, m1)]),            # 4  head-1 BN scale
        row([(ct1, 0), (dt1, m1)]),            # 5  head-1 BN shift
        row([(cb2, 0), (db2, m2)]),            # 6  head-2 bias
        row([(cs2, 0), (ds2, m2)]),            # 7  head-2 BN scale
        row([(ct2, 0), (dt2, m2)]),            # 8  head-2 BN shift
        row([(cb3, d0), (db3, d0 + 1)]),       # 9  head-3 bias (lanes d0, d0+1)
        row([(e0b, 0), (ob1, HALF)]),          # 10 dec1 | partDm-1 bias
        row([(os1, HALF)]),                    # 11 partDm-1 BN scale
        row([(ot1, HALF)]),                    # 12 partDm-1 BN shift
        row([(e1b, 0), (ob2, HALF)]),          # 13 dec2 | partDm-2 bias
        row([(os2, HALF)]),                    # 14 partDm-2 BN scale
        row([(ot2, HALF)]),                    # 15 partDm-2 BN shift
        row([(e2b, 0), (ob3, d0 + 2)]),        # 16 dec3 bias | partDm-3 bias (lane d0+2)
    ]
    v_slab = jnp.stack(v_rows)                 # (17, 128) f32

    assert w_slab.shape == (NUM_W, PAD, PAD)
    assert v_slab.shape == (NUM_V, PAD)
    return {"w": w_slab, "v": v_slab}


# ------------------------------ forward wrapper ------------------------------

@jax.jit
def complete_model_forward(packed, input_data, alpha):
    del alpha  # ReverseLayerF is identity in the forward pass
    n, d0 = input_data.shape
    num_w = packed["w"].shape[0]
    x = input_data.astype(jnp.float32)

    out = pl.pallas_call(
        functools.partial(fused_forward_kernel, d0=d0, num_w=num_w),
        out_shape=jax.ShapeDtypeStruct((n, PAD), jnp.float32),
        in_specs=[
            pl.BlockSpec(memory_space=pltpu.MemorySpace.VMEM),   # x (N, d0)
            pl.BlockSpec(memory_space=pl.ANY),                   # weight slab stays in HBM
            pl.BlockSpec(memory_space=pltpu.MemorySpace.VMEM),   # bias/BN slab
        ],
        out_specs=pl.BlockSpec(memory_space=pltpu.MemorySpace.VMEM),
        scratch_shapes=[
            pltpu.VMEM((num_w, PAD, PAD), jnp.bfloat16),         # streamed weight tiles
            pltpu.SemaphoreType.DMA((num_w,)),
        ],
    )(x, packed["w"], packed["v"])

    reconstruct = out[:, :d0]
    class_output = out[:, d0:d0 + 1]
    domain_output = out[:, d0 + 1:d0 + 2]
    part_dm_output = out[:, d0 + 2:d0 + 3]
    return reconstruct, class_output, domain_output, part_dm_output


# ------------------------------ pure-JAX reference ---------------------------

def reference_forward(raw, x, alpha):
    del alpha

    def dot(a, b):
        return jnp.dot(a, b, precision="highest")

    def mlp3(h, layers):
        for w, b in layers:
            h = jax.nn.sigmoid(dot(h, w) + b)
        return h

    def head(h, p):
        w1, b1, s1, t1, w2, b2, s2, t2, w3, b3 = p
        h = jnp.maximum(dot(h, w1) + b1, 0.0) * s1 + t1
        h = jnp.maximum(dot(h, w2) + b2, 0.0) * s2 + t2
        return jax.nn.sigmoid(dot(h, w3) + b3)

    hid = mlp3(x, raw["enc"])
    cls = head(hid, raw["clf"])
    rec = mlp3(hid, raw["dec"])
    dom = head(hid, raw["dm"])
    part = head(hid * cls, raw["dm_o"])
    return rec, cls, dom, part


# ------------------------------------ main -----------------------------------

if __name__ == "__main__":
    layer_list = [32, 24, 16, 8]        # encoder: 32 -> 24 -> 16 -> 8
    hidden_dim = layer_list[-1]
    batch = 8

    root = jax.random.PRNGKey(0)
    k_params, k_x = jax.random.split(root)
    raw = init_raw_params(k_params, layer_list, hidden_dim)
    packed = pack_params(raw)
    x = jax.random.normal(k_x, (batch, layer_list[0]), jnp.float32)
    alpha = jnp.float32(0.5)

    outs = complete_model_forward(packed, x, alpha)
    outs = jax.block_until_ready(outs)

    reconstruct, class_output, domain_output, part_dm_output = outs
    assert reconstruct.shape == (batch, layer_list[0])
    assert class_output.shape == (batch, 1)
    assert domain_output.shape == (batch, 1)
    assert part_dm_output.shape == (batch, 1)
    assert all(bool(jnp.all(jnp.isfinite(o))) for o in outs)

    # correctness vs pure-JAX reference (same bf16-rounded weights, exact sigmoid)
    refs = reference_forward(raw, x, alpha)
    max_err = max(float(jnp.max(jnp.abs(a - b))) for a, b in zip(outs, refs))
    assert max_err < 2e-2, f"mismatch vs reference: {max_err}"

    print("KERNEL_OK")
</pallas_src>

<mosaic_0001>
module attributes {stable_mosaic.version = 11 : i64} {
  func.func @fused_forward_kernel(%arg0: memref<8x32xf32, #tpu.memory_space<vmem>>, %arg1: memref<9x128x128xbf16, #tpu.memory_space<any>>, %arg2: memref<17x128xf32, #tpu.memory_space<vmem>>, %arg3: memref<8x128xf32, #tpu.memory_space<vmem>>, %arg4: memref<9x128x128xbf16, #tpu.memory_space<vmem>>, %arg5: memref<9x!tpu.dma_semaphore, #tpu.memory_space<semaphore_mem>>) attributes {dimension_semantics = [], scalar_prefetch = 0 : i64, scratch_operands = 2 : i64, tpu.core_type = #tpu.core_type<tc>} {
    %c0_i32 = arith.constant 0 : i32
    %c0_i32_0 = arith.constant 0 : i32
    %c0_i32_1 = arith.constant 0 : i32
    %c0_i32_2 = arith.constant 0 : i32
    %c0_i32_3 = arith.constant 0 : i32
    %0 = tpu.memref_slice %arg1[%c0_i32, %c0_i32_2, %c0_i32_3] : memref<9x128x128xbf16, #tpu.memory_space<any>> -> memref<1x128x128xbf16, #tpu.memory_space<any>>
    %1 = tpu.memref_squeeze %0 : memref<1x128x128xbf16, #tpu.memory_space<any>> -> memref<128x128xbf16, #tpu.memory_space<any>>
    %c0_i32_4 = arith.constant 0 : i32
    %c0_i32_5 = arith.constant 0 : i32
    %2 = tpu.memref_slice %arg4[%c0_i32_0, %c0_i32_4, %c0_i32_5] : memref<9x128x128xbf16, #tpu.memory_space<vmem>> -> memref<1x128x128xbf16, #tpu.memory_space<vmem>>
    %3 = tpu.memref_squeeze %2 : memref<1x128x128xbf16, #tpu.memory_space<vmem>> -> memref<128x128xbf16, #tpu.memory_space<vmem>>
    %4 = tpu.memref_slice %arg5[%c0_i32_1] : memref<9x!tpu.dma_semaphore, #tpu.memory_space<semaphore_mem>> -> memref<1x!tpu.dma_semaphore, #tpu.memory_space<semaphore_mem>>
    %5 = tpu.memref_squeeze %4 : memref<1x!tpu.dma_semaphore, #tpu.memory_space<semaphore_mem>> -> memref<!tpu.dma_semaphore, #tpu.memory_space<semaphore_mem>>
    tpu.enqueue_dma source(%1 : memref<128x128xbf16, #tpu.memory_space<any>>) target(%3 : memref<128x128xbf16, #tpu.memory_space<vmem>>) target_semaphore(%5 : memref<!tpu.dma_semaphore, #tpu.memory_space<semaphore_mem>>)
    %c1_i32 = arith.constant 1 : i32
    %c1_i32_6 = arith.constant 1 : i32
    %c1_i32_7 = arith.constant 1 : i32
    %c0_i32_8 = arith.constant 0 : i32
    %c0_i32_9 = arith.constant 0 : i32
    %6 = tpu.memref_slice %arg1[%c1_i32, %c0_i32_8, %c0_i32_9] : memref<9x128x128xbf16, #tpu.memory_space<any>> -> memref<1x128x128xbf16, #tpu.memory_space<any>>
    %7 = tpu.memref_squeeze %6 : memref<1x128x128xbf16, #tpu.memory_space<any>> -> memref<128x128xbf16, #tpu.memory_space<any>>
    %c0_i32_10 = arith.constant 0 : i32
    %c0_i32_11 = arith.constant 0 : i32
    %8 = tpu.memref_slice %arg4[%c1_i32_6, %c0_i32_10, %c0_i32_11] : memref<9x128x128xbf16, #tpu.memory_space<vmem>> -> memref<1x128x128xbf16, #tpu.memory_space<vmem>>
    %9 = tpu.memref_squeeze %8 : memref<1x128x128xbf16, #tpu.memory_space<vmem>> -> memref<128x128xbf16, #tpu.memory_space<vmem>>
    %10 = tpu.memref_slice %arg5[%c1_i32_7] : memref<9x!tpu.dma_semaphore, #tpu.memory_space<semaphore_mem>> -> memref<1x!tpu.dma_semaphore, #tpu.memory_space<semaphore_mem>>
    %11 = tpu.memref_squeeze %10 : memref<1x!tpu.dma_semaphore, #tpu.memory_space<semaphore_mem>> -> memref<!tpu.dma_semaphore, #tpu.memory_space<semaphore_mem>>
    tpu.enqueue_dma source(%7 : memref<128x128xbf16, #tpu.memory_space<any>>) target(%9 : memref<128x128xbf16, #tpu.memory_space<vmem>>) target_semaphore(%11 : memref<!tpu.dma_semaphore, #tpu.memory_space<semaphore_mem>>)
    %c2_i32 = arith.constant 2 : i32
    %c2_i32_12 = arith.constant 2 : i32
    %c2_i32_13 = arith.constant 2 : i32
    %c0_i32_14 = arith.constant 0 : i32
    %c0_i32_15 = arith.constant 0 : i32
    %12 = tpu.memref_slice %arg1[%c2_i32, %c0_i32_14, %c0_i32_15] : memref<9x128x128xbf16, #tpu.memory_space<any>> -> memref<1x128x128xbf16, #tpu.memory_space<any>>
    %13 = tpu.memref_squeeze %12 : memref<1x128x128xbf16, #tpu.memory_space<any>> -> memref<128x128xbf16, #tpu.memory_space<any>>
    %c0_i32_16 = arith.constant 0 : i32
    %c0_i32_17 = arith.constant 0 : i32
    %14 = tpu.memref_slice %arg4[%c2_i32_12, %c0_i32_16, %c0_i32_17] : memref<9x128x128xbf16, #tpu.memory_space<vmem>> -> memref<1x128x128xbf16, #tpu.memory_space<vmem>>
    %15 = tpu.memref_squeeze %14 : memref<1x128x128xbf16, #tpu.memory_space<vmem>> -> memref<128x128xbf16, #tpu.memory_space<vmem>>
    %16 = tpu.memref_slice %arg5[%c2_i32_13] : memref<9x!tpu.dma_semaphore, #tpu.memory_space<semaphore_mem>> -> memref<1x!tpu.dma_semaphore, #tpu.memory_space<semaphore_mem>>
    %17 = tpu.memref_squeeze %16 : memref<1x!tpu.dma_semaphore, #tpu.memory_space<semaphore_mem>> -> memref<!tpu.dma_semaphore, #tpu.memory_space<semaphore_mem>>
    tpu.enqueue_dma source(%13 : memref<128x128xbf16, #tpu.memory_space<any>>) target(%15 : memref<128x128xbf16, #tpu.memory_space<vmem>>) target_semaphore(%17 : memref<!tpu.dma_semaphore, #tpu.memory_space<semaphore_mem>>)
    %c3_i32 = arith.constant 3 : i32
    %c3_i32_18 = arith.constant 3 : i32
    %c3_i32_19 = arith.constant 3 : i32
    %c0_i32_20 = arith.constant 0 : i32
    %c0_i32_21 = arith.constant 0 : i32
    %18 = tpu.memref_slice %arg1[%c3_i32, %c0_i32_20, %c0_i32_21] : memref<9x128x128xbf16, #tpu.memory_space<any>> -> memref<1x128x128xbf16, #tpu.memory_space<any>>
    %19 = tpu.memref_squeeze %18 : memref<1x128x128xbf16, #tpu.memory_space<any>> -> memref<128x128xbf16, #tpu.memory_space<any>>
    %c0_i32_22 = arith.constant 0 : i32
    %c0_i32_23 = arith.constant 0 : i32
    %20 = tpu.memref_slice %arg4[%c3_i32_18, %c0_i32_22, %c0_i32_23] : memref<9x128x128xbf16, #tpu.memory_space<vmem>> -> memref<1x128x128xbf16, #tpu.memory_space<vmem>>
    %21 = tpu.memref_squeeze %20 : memref<1x128x128xbf16, #tpu.memory_space<vmem>> -> memref<128x128xbf16, #tpu.memory_space<vmem>>
    %22 = tpu.memref_slice %arg5[%c3_i32_19] : memref<9x!tpu.dma_semaphore, #tpu.memory_space<semaphore_mem>> -> memref<1x!tpu.dma_semaphore, #tpu.memory_space<semaphore_mem>>
    %23 = tpu.memref_squeeze %22 : memref<1x!tpu.dma_semaphore, #tpu.memory_space<semaphore_mem>> -> memref<!tpu.dma_semaphore, #tpu.memory_space<semaphore_mem>>
    tpu.enqueue_dma source(%19 : memref<128x128xbf16, #tpu.memory_space<any>>) target(%21 : memref<128x128xbf16, #tpu.memory_space<vmem>>) target_semaphore(%23 : memref<!tpu.dma_semaphore, #tpu.memory_space<semaphore_mem>>)
    %c4_i32 = arith.constant 4 : i32
    %c4_i32_24 = arith.constant 4 : i32
    %c4_i32_25 = arith.constant 4 : i32
    %c0_i32_26 = arith.constant 0 : i32
    %c0_i32_27 = arith.constant 0 : i32
    %24 = tpu.memref_slice %arg1[%c4_i32, %c0_i32_26, %c0_i32_27] : memref<9x128x128xbf16, #tpu.memory_space<any>> -> memref<1x128x128xbf16, #tpu.memory_space<any>>
    %25 = tpu.memref_squeeze %24 : memref<1x128x128xbf16, #tpu.memory_space<any>> -> memref<128x128xbf16, #tpu.memory_space<any>>
    %c0_i32_28 = arith.constant 0 : i32
    %c0_i32_29 = arith.constant 0 : i32
    %26 = tpu.memref_slice %arg4[%c4_i32_24, %c0_i32_28, %c0_i32_29] : memref<9x128x128xbf16, #tpu.memory_space<vmem>> -> memref<1x128x128xbf16, #tpu.memory_space<vmem>>
    %27 = tpu.memref_squeeze %26 : memref<1x128x128xbf16, #tpu.memory_space<vmem>> -> memref<128x128xbf16, #tpu.memory_space<vmem>>
    %28 = tpu.memref_slice %arg5[%c4_i32_25] : memref<9x!tpu.dma_semaphore, #tpu.memory_space<semaphore_mem>> -> memref<1x!tpu.dma_semaphore, #tpu.memory_space<semaphore_mem>>
    %29 = tpu.memref_squeeze %28 : memref<1x!tpu.dma_semaphore, #tpu.memory_space<semaphore_mem>> -> memref<!tpu.dma_semaphore, #tpu.memory_space<semaphore_mem>>
    tpu.enqueue_dma source(%25 : memref<128x128xbf16, #tpu.memory_space<any>>) target(%27 : memref<128x128xbf16, #tpu.memory_space<vmem>>) target_semaphore(%29 : memref<!tpu.dma_semaphore, #tpu.memory_space<semaphore_mem>>)
    %c5_i32 = arith.constant 5 : i32
    %c5_i32_30 = arith.constant 5 : i32
    %c5_i32_31 = arith.constant 5 : i32
    %c0_i32_32 = arith.constant 0 : i32
    %c0_i32_33 = arith.constant 0 : i32
    %30 = tpu.memref_slice %arg1[%c5_i32, %c0_i32_32, %c0_i32_33] : memref<9x128x128xbf16, #tpu.memory_space<any>> -> memref<1x128x128xbf16, #tpu.memory_space<any>>
    %31 = tpu.memref_squeeze %30 : memref<1x128x128xbf16, #tpu.memory_space<any>> -> memref<128x128xbf16, #tpu.memory_space<any>>
    %c0_i32_34 = arith.constant 0 : i32
    %c0_i32_35 = arith.constant 0 : i32
    %32 = tpu.memref_slice %arg4[%c5_i32_30, %c0_i32_34, %c0_i32_35] : memref<9x128x128xbf16, #tpu.memory_space<vmem>> -> memref<1x128x128xbf16, #tpu.memory_space<vmem>>
    %33 = tpu.memref_squeeze %32 : memref<1x128x128xbf16, #tpu.memory_space<vmem>> -> memref<128x128xbf16, #tpu.memory_space<vmem>>
    %34 = tpu.memref_slice %arg5[%c5_i32_31] : memref<9x!tpu.dma_semaphore, #tpu.memory_space<semaphore_mem>> -> memref<1x!tpu.dma_semaphore, #tpu.memory_space<semaphore_mem>>
    %35 = tpu.memref_squeeze %34 : memref<1x!tpu.dma_semaphore, #tpu.memory_space<semaphore_mem>> -> memref<!tpu.dma_semaphore, #tpu.memory_space<semaphore_mem>>
    tpu.enqueue_dma source(%31 : memref<128x128xbf16, #tpu.memory_space<any>>) target(%33 : memref<128x128xbf16, #tpu.memory_space<vmem>>) target_semaphore(%35 : memref<!tpu.dma_semaphore, #tpu.memory_space<semaphore_mem>>)
    %c6_i32 = arith.constant 6 : i32
    %c6_i32_36 = arith.constant 6 : i32
    %c6_i32_37 = arith.constant 6 : i32
    %c0_i32_38 = arith.constant 0 : i32
    %c0_i32_39 = arith.constant 0 : i32
    %36 = tpu.memref_slice %arg1[%c6_i32, %c0_i32_38, %c0_i32_39] : memref<9x128x128xbf16, #tpu.memory_space<any>> -> memref<1x128x128xbf16, #tpu.memory_space<any>>
    %37 = tpu.memref_squeeze %36 : memref<1x128x128xbf16, #tpu.memory_space<any>> -> memref<128x128xbf16, #tpu.memory_space<any>>
    %c0_i32_40 = arith.constant 0 : i32
    %c0_i32_41 = arith.constant 0 : i32
    %38 = tpu.memref_slice %arg4[%c6_i32_36, %c0_i32_40, %c0_i32_41] : memref<9x128x128xbf16, #tpu.memory_space<vmem>> -> memref<1x128x128xbf16, #tpu.memory_space<vmem>>
    %39 = tpu.memref_squeeze %38 : memref<1x128x128xbf16, #tpu.memory_space<vmem>> -> memref<128x128xbf16, #tpu.memory_space<vmem>>
    %40 = tpu.memref_slice %arg5[%c6_i32_37] : memref<9x!tpu.dma_semaphore, #tpu.memory_space<semaphore_mem>> -> memref<1x!tpu.dma_semaphore, #tpu.memory_space<semaphore_mem>>
    %41 = tpu.memref_squeeze %40 : memref<1x!tpu.dma_semaphore, #tpu.memory_space<semaphore_mem>> -> memref<!tpu.dma_semaphore, #tpu.memory_space<semaphore_mem>>
    tpu.enqueue_dma source(%37 : memref<128x128xbf16, #tpu.memory_space<any>>) target(%39 : memref<128x128xbf16, #tpu.memory_space<vmem>>) target_semaphore(%41 : memref<!tpu.dma_semaphore, #tpu.memory_space<semaphore_mem>>)
    %c7_i32 = arith.constant 7 : i32
    %c7_i32_42 = arith.constant 7 : i32
    %c7_i32_43 = arith.constant 7 : i32
    %c0_i32_44 = arith.constant 0 : i32
    %c0_i32_45 = arith.constant 0 : i32
    %42 = tpu.memref_slice %arg1[%c7_i32, %c0_i32_44, %c0_i32_45] : memref<9x128x128xbf16, #tpu.memory_space<any>> -> memref<1x128x128xbf16, #tpu.memory_space<any>>
    %43 = tpu.memref_squeeze %42 : memref<1x128x128xbf16, #tpu.memory_space<any>> -> memref<128x128xbf16, #tpu.memory_space<any>>
    %c0_i32_46 = arith.constant 0 : i32
    %c0_i32_47 = arith.constant 0 : i32
    %44 = tpu.memref_slice %arg4[%c7_i32_42, %c0_i32_46, %c0_i32_47] : memref<9x128x128xbf16, #tpu.memory_space<vmem>> -> memref<1x128x128xbf16, #tpu.memory_space<vmem>>
    %45 = tpu.memref_squeeze %44 : memref<1x128x128xbf16, #tpu.memory_space<vmem>> -> memref<128x128xbf16, #tpu.memory_space<vmem>>
    %46 = tpu.memref_slice %arg5[%c7_i32_43] : memref<9x!tpu.dma_semaphore, #tpu.memory_space<semaphore_mem>> -> memref<1x!tpu.dma_semaphore, #tpu.memory_space<semaphore_mem>>
    %47 = tpu.memref_squeeze %46 : memref<1x!tpu.dma_semaphore, #tpu.memory_space<semaphore_mem>> -> memref<!tpu.dma_semaphore, #tpu.memory_space<semaphore_mem>>
    tpu.enqueue_dma source(%43 : memref<128x128xbf16, #tpu.memory_space<any>>) target(%45 : memref<128x128xbf16, #tpu.memory_space<vmem>>) target_semaphore(%47 : memref<!tpu.dma_semaphore, #tpu.memory_space<semaphore_mem>>)
    %c8_i32 = arith.constant 8 : i32
    %c8_i32_48 = arith.constant 8 : i32
    %c8_i32_49 = arith.constant 8 : i32
    %c0_i32_50 = arith.constant 0 : i32
    %c0_i32_51 = arith.constant 0 : i32
    %48 = tpu.memref_slice %arg1[%c8_i32, %c0_i32_50, %c0_i32_51] : memref<9x128x128xbf16, #tpu.memory_space<any>> -> memref<1x128x128xbf16, #tpu.memory_space<any>>
    %49 = tpu.memref_squeeze %48 : memref<1x128x128xbf16, #tpu.memory_space<any>> -> memref<128x128xbf16, #tpu.memory_space<any>>
    %c0_i32_52 = arith.constant 0 : i32
    %c0_i32_53 = arith.constant 0 : i32
    %50 = tpu.memref_slice %arg4[%c8_i32_48, %c0_i32_52, %c0_i32_53] : memref<9x128x128xbf16, #tpu.memory_space<vmem>> -> memref<1x128x128xbf16, #tpu.memory_space<vmem>>
    %51 = tpu.memref_squeeze %50 : memref<1x128x128xbf16, #tpu.memory_space<vmem>> -> memref<128x128xbf16, #tpu.memory_space<vmem>>
    %52 = tpu.memref_slice %arg5[%c8_i32_49] : memref<9x!tpu.dma_semaphore, #tpu.memory_space<semaphore_mem>> -> memref<1x!tpu.dma_semaphore, #tpu.memory_space<semaphore_mem>>
    %53 = tpu.memref_squeeze %52 : memref<1x!tpu.dma_semaphore, #tpu.memory_space<semaphore_mem>> -> memref<!tpu.dma_semaphore, #tpu.memory_space<semaphore_mem>>
    tpu.enqueue_dma source(%49 : memref<128x128xbf16, #tpu.memory_space<any>>) target(%51 : memref<128x128xbf16, #tpu.memory_space<vmem>>) target_semaphore(%53 : memref<!tpu.dma_semaphore, #tpu.memory_space<semaphore_mem>>)
    %c0 = arith.constant 0 : index
    %c0_54 = arith.constant 0 : index
    %54 = vector.load %arg0[%c0, %c0_54] : memref<8x32xf32, #tpu.memory_space<vmem>>, vector<8x32xf32>
    %c0_i32_55 = arith.constant 0 : i32
    %c0_i32_56 = arith.constant 0 : i32
    %c0_i32_57 = arith.constant 0 : i32
    %c0_i32_58 = arith.constant 0 : i32
    %c0_i32_59 = arith.constant 0 : i32
    %55 = tpu.memref_slice %arg1[%c0_i32_55, %c0_i32_58, %c0_i32_59] : memref<9x128x128xbf16, #tpu.memory_space<any>> -> memref<1x128x128xbf16, #tpu.memory_space<any>>
    %56 = tpu.memref_squeeze %55 : memref<1x128x128xbf16, #tpu.memory_space<any>> -> memref<128x128xbf16, #tpu.memory_space<any>>
    %c0_i32_60 = arith.constant 0 : i32
    %c0_i32_61 = arith.constant 0 : i32
    %57 = tpu.memref_slice %arg4[%c0_i32_56, %c0_i32_60, %c0_i32_61] : memref<9x128x128xbf16, #tpu.memory_space<vmem>> -> memref<1x128x128xbf16, #tpu.memory_space<vmem>>
    %58 = tpu.memref_squeeze %57 : memref<1x128x128xbf16, #tpu.memory_space<vmem>> -> memref<128x128xbf16, #tpu.memory_space<vmem>>
    %59 = tpu.memref_slice %arg5[%c0_i32_57] : memref<9x!tpu.dma_semaphore, #tpu.memory_space<semaphore_mem>> -> memref<1x!tpu.dma_semaphore, #tpu.memory_space<semaphore_mem>>
    %60 = tpu.memref_squeeze %59 : memref<1x!tpu.dma_semaphore, #tpu.memory_space<semaphore_mem>> -> memref<!tpu.dma_semaphore, #tpu.memory_space<semaphore_mem>>
    tpu.wait_dma2 semaphore(%60 : memref<!tpu.dma_semaphore, #tpu.memory_space<semaphore_mem>>) src(%56 : memref<128x128xbf16, #tpu.memory_space<any>>) dst(%58 : memref<128x128xbf16, #tpu.memory_space<vmem>>)
    %c0_62 = arith.constant 0 : index
    %c0_63 = arith.constant 0 : index
    %c0_64 = arith.constant 0 : index
    %61 = vector.load %arg4[%c0_62, %c0_63, %c0_64] : memref<9x128x128xbf16, #tpu.memory_space<vmem>>, vector<1x32x128xbf16>
    %62 = vector.shape_cast %61 : vector<1x32x128xbf16> to vector<32x128xbf16>
    %63 = arith.extf %62 : vector<32x128xbf16> to vector<32x128xf32>
    %cst = arith.constant dense<0.000000e+00> : vector<8x128xf32>
    %64 = tpu.matmul %54, %63, %cst {dimension_numbers = #tpu.dot_dimension_numbers<[1], [0], [0], [1], [0, 0, 1, 1], [], []>} : vector<8x32xf32>, vector<32x128xf32>, vector<8x128xf32> -> vector<8x128xf32>
    %c0_65 = arith.constant 0 : index
    %c0_66 = arith.constant 0 : index
    %65 = vector.load %arg2[%c0_65, %c0_66] : memref<17x128xf32, #tpu.memory_space<vmem>>, vector<1x128xf32>
    %66 = vector.broadcast %65 : vector<1x128xf32> to vector<8x128xf32>
    %67 = arith.addf %64, %66 : vector<8x128xf32>
    %cst_67 = arith.constant 0.000000e+00 : f32
    %68 = vector.broadcast %cst_67 : f32 to vector<8x128xf32>
    %69 = arith.subf %68, %67 : vector<8x128xf32>
    %70 = math.exp %69 : vector<8x128xf32>
    %cst_68 = arith.constant 1.000000e+00 : f32
    %71 = vector.broadcast %cst_68 : f32 to vector<8x128xf32>
    %72 = arith.addf %71, %70 : vector<8x128xf32>
    %cst_69 = arith.constant 1.000000e+00 : f32
    %73 = vector.broadcast %cst_69 : f32 to vector<8x128xf32>
    %74 = arith.divf %73, %72 : vector<8x128xf32>
    %c1_i32_70 = arith.constant 1 : i32
    %c1_i32_71 = arith.constant 1 : i32
    %c1_i32_72 = arith.constant 1 : i32
    %c0_i32_73 = arith.constant 0 : i32
    %c0_i32_74 = arith.constant 0 : i32
    %75 = tpu.memref_slice %arg1[%c1_i32_70, %c0_i32_73, %c0_i32_74] : memref<9x128x128xbf16, #tpu.memory_space<any>> -> memref<1x128x128xbf16, #tpu.memory_space<any>>
    %76 = tpu.memref_squeeze %75 : memref<1x128x128xbf16, #tpu.memory_space<any>> -> memref<128x128xbf16, #tpu.memory_space<any>>
    %c0_i32_75 = arith.constant 0 : i32
    %c0_i32_76 = arith.constant 0 : i32
    %77 = tpu.memref_slice %arg4[%c1_i32_71, %c0_i32_75, %c0_i32_76] : memref<9x128x128xbf16, #tpu.memory_space<vmem>> -> memref<1x128x128xbf16, #tpu.memory_space<vmem>>
    %78 = tpu.memref_squeeze %77 : memref<1x128x128xbf16, #tpu.memory_space<vmem>> -> memref<128x128xbf16, #tpu.memory_space<vmem>>
    %79 = tpu.memref_slice %arg5[%c1_i32_72] : memref<9x!tpu.dma_semaphore, #tpu.memory_space<semaphore_mem>> -> memref<1x!tpu.dma_semaphore, #tpu.memory_space<semaphore_mem>>
    %80 = tpu.memref_squeeze %79 : memref<1x!tpu.dma_semaphore, #tpu.memory_space<semaphore_mem>> -> memref<!tpu.dma_semaphore, #tpu.memory_space<semaphore_mem>>
    tpu.wait_dma2 semaphore(%80 : memref<!tpu.dma_semaphore, #tpu.memory_space<semaphore_mem>>) src(%76 : memref<128x128xbf16, #tpu.memory_space<any>>) dst(%78 : memref<128x128xbf16, #tpu.memory_space<vmem>>)
    %c1 = arith.constant 1 : index
    %c0_77 = arith.constant 0 : index
    %c0_78 = arith.constant 0 : index
    %81 = vector.load %arg4[%c1, %c0_77, %c0_78] : memref<9x128x128xbf16, #tpu.memory_space<vmem>>, vector<1x128x128xbf16>
    %82 = vector.shape_cast %81 : vector<1x128x128xbf16> to vector<128x128xbf16>
    %83 = arith.extf %82 : vector<128x128xbf16> to vector<128x128xf32>
    %cst_79 = arith.constant dense<0.000000e+00> : vector<8x128xf32>
    %84 = tpu.matmul %74, %83, %cst_79 {dimension_numbers = #tpu.dot_dimension_numbers<[1], [0], [0], [1], [0, 0, 1, 1], [], []>} : vector<8x128xf32>, vector<128x128xf32>, vector<8x128xf32> -> vector<8x128xf32>
    %c1_80 = arith.constant 1 : index
    %c0_81 = arith.constant 0 : index
    %85 = vector.load %arg2[%c1_80, %c0_81] : memref<17x128xf32, #tpu.memory_space<vmem>>, vector<1x128xf32>
    %86 = vector.broadcast %85 : vector<1x128xf32> to vector<8x128xf32>
    %87 = arith.addf %84, %86 : vector<8x128xf32>
    %cst_82 = arith.constant 0.000000e+00 : f32
    %88 = vector.broadcast %cst_82 : f32 to vector<8x128xf32>
    %89 = arith.subf %88, %87 : vector<8x128xf32>
    %90 = math.exp %89 : vector<8x128xf32>
    %cst_83 = arith.constant 1.000000e+00 : f32
    %91 = vector.broadcast %cst_83 : f32 to vector<8x128xf32>
    %92 = arith.addf %91, %90 : vector<8x128xf32>
    %cst_84 = arith.constant 1.000000e+00 : f32
    %93 = vector.broadcast %cst_84 : f32 to vector<8x128xf32>
    %94 = arith.divf %93, %92 : vector<8x128xf32>
    %c2_i32_85 = arith.constant 2 : i32
    %c2_i32_86 = arith.constant 2 : i32
    %c2_i32_87 = arith.constant 2 : i32
    %c0_i32_88 = arith.constant 0 : i32
    %c0_i32_89 = arith.constant 0 : i32
    %95 = tpu.memref_slice %arg1[%c2_i32_85, %c0_i32_88, %c0_i32_89] : memref<9x128x128xbf16, #tpu.memory_space<any>> -> memref<1x128x128xbf16, #tpu.memory_space<any>>
    %96 = tpu.memref_squeeze %95 : memref<1x128x128xbf16, #tpu.memory_space<any>> -> memref<128x128xbf16, #tpu.memory_space<any>>
    %c0_i32_90 = arith.constant 0 : i32
    %c0_i32_91 = arith.constant 0 : i32
    %97 = tpu.memref_slice %arg4[%c2_i32_86, %c0_i32_90, %c0_i32_91] : memref<9x128x128xbf16, #tpu.memory_space<vmem>> -> memref<1x128x128xbf16, #tpu.memory_space<vmem>>
    %98 = tpu.memref_squeeze %97 : memref<1x128x128xbf16, #tpu.memory_space<vmem>> -> memref<128x128xbf16, #tpu.memory_space<vmem>>
    %99 = tpu.memref_slice %arg5[%c2_i32_87] : memref<9x!tpu.dma_semaphore, #tpu.memory_space<semaphore_mem>> -> memref<1x!tpu.dma_semaphore, #tpu.memory_space<semaphore_mem>>
    %100 = tpu.memref_squeeze %99 : memref<1x!tpu.dma_semaphore, #tpu.memory_space<semaphore_mem>> -> memref<!tpu.dma_semaphore, #tpu.memory_space<semaphore_mem>>
    tpu.wait_dma2 semaphore(%100 : memref<!tpu.dma_semaphore, #tpu.memory_space<semaphore_mem>>) src(%96 : memref<128x128xbf16, #tpu.memory_space<any>>) dst(%98 : memref<128x128xbf16, #tpu.memory_space<vmem>>)
    %c2 = arith.constant 2 : index
    %c0_92 = arith.constant 0 : index
    %c0_93 = arith.constant 0 : index
    %101 = vector.load %arg4[%c2, %c0_92, %c0_93] : memref<9x128x128xbf16, #tpu.memory_space<vmem>>, vector<1x128x128xbf16>
    %102 = vector.shape_cast %101 : vector<1x128x128xbf16> to vector<128x128xbf16>
    %103 = arith.extf %102 : vector<128x128xbf16> to vector<128x128xf32>
    %cst_94 = arith.constant dense<0.000000e+00> : vector<8x128xf32>
    %104 = tpu.matmul %94, %103, %cst_94 {dimension_numbers = #tpu.dot_dimension_numbers<[1], [0], [0], [1], [0, 0, 1, 1], [], []>} : vector<8x128xf32>, vector<128x128xf32>, vector<8x128xf32> -> vector<8x128xf32>
    %c2_95 = arith.constant 2 : index
    %c0_96 = arith.constant 0 : index
    %105 = vector.load %arg2[%c2_95, %c0_96] : memref<17x128xf32, #tpu.memory_space<vmem>>, vector<1x128xf32>
    %106 = vector.broadcast %105 : vector<1x128xf32> to vector<8x128xf32>
    %107 = arith.addf %104, %106 : vector<8x128xf32>
    %cst_97 = arith.constant 0.000000e+00 : f32
    %108 = vector.broadcast %cst_97 : f32 to vector<8x128xf32>
    %109 = arith.subf %108, %107 : vector<8x128xf32>
    %110 = math.exp %109 : vector<8x128xf32>
    %cst_98 = arith.constant 1.000000e+00 : f32
    %111 = vector.broadcast %cst_98 : f32 to vector<8x128xf32>
    %112 = arith.addf %111, %110 : vector<8x128xf32>
    %cst_99 = arith.constant 1.000000e+00 : f32
    %113 = vector.broadcast %cst_99 : f32 to vector<8x128xf32>
    %114 = arith.divf %113, %112 : vector<8x128xf32>
    %c3_i32_100 = arith.constant 3 : i32
    %c3_i32_101 = arith.constant 3 : i32
    %c3_i32_102 = arith.constant 3 : i32
    %c0_i32_103 = arith.constant 0 : i32
    %c0_i32_104 = arith.constant 0 : i32
    %115 = tpu.memref_slice %arg1[%c3_i32_100, %c0_i32_103, %c0_i32_104] : memref<9x128x128xbf16, #tpu.memory_space<any>> -> memref<1x128x128xbf16, #tpu.memory_space<any>>
    %116 = tpu.memref_squeeze %115 : memref<1x128x128xbf16, #tpu.memory_space<any>> -> memref<128x128xbf16, #tpu.memory_space<any>>
    %c0_i32_105 = arith.constant 0 : i32
    %c0_i32_106 = arith.constant 0 : i32
    %117 = tpu.memref_slice %arg4[%c3_i32_101, %c0_i32_105, %c0_i32_106] : memref<9x128x128xbf16, #tpu.memory_space<vmem>> -> memref<1x128x128xbf16, #tpu.memory_space<vmem>>
    %118 = tpu.memref_squeeze %117 : memref<1x128x128xbf16, #tpu.memory_space<vmem>> -> memref<128x128xbf16, #tpu.memory_space<vmem>>
    %119 = tpu.memref_slice %arg5[%c3_i32_102] : memref<9x!tpu.dma_semaphore, #tpu.memory_space<semaphore_mem>> -> memref<1x!tpu.dma_semaphore, #tpu.memory_space<semaphore_mem>>
    %120 = tpu.memref_squeeze %119 : memref<1x!tpu.dma_semaphore, #tpu.memory_space<semaphore_mem>> -> memref<!tpu.dma_semaphore, #tpu.memory_space<semaphore_mem>>
    tpu.wait_dma2 semaphore(%120 : memref<!tpu.dma_semaphore, #tpu.memory_space<semaphore_mem>>) src(%116 : memref<128x128xbf16, #tpu.memory_space<any>>) dst(%118 : memref<128x128xbf16, #tpu.memory_space<vmem>>)
    %c3 = arith.constant 3 : index
    %c0_107 = arith.constant 0 : index
    %c0_108 = arith.constant 0 : index
    %121 = vector.load %arg4[%c3, %c0_107, %c0_108] : memref<9x128x128xbf16, #tpu.memory_space<vmem>>, vector<1x128x128xbf16>
    %122 = vector.shape_cast %121 : vector<1x128x128xbf16> to vector<128x128xbf16>
    %123 = arith.extf %122 : vector<128x128xbf16> to vector<128x128xf32>
    %cst_109 = arith.constant dense<0.000000e+00> : vector<8x128xf32>
    %124 = tpu.matmul %114, %123, %cst_109 {dimension_numbers = #tpu.dot_dimension_numbers<[1], [0], [0], [1], [0, 0, 1, 1], [], []>} : vector<8x128xf32>, vector<128x128xf32>, vector<8x128xf32> -> vector<8x128xf32>
    %c3_110 = arith.constant 3 : index
    %c0_111 = arith.constant 0 : index
    %125 = vector.load %arg2[%c3_110, %c0_111] : memref<17x128xf32, #tpu.memory_space<vmem>>, vector<1x128xf32>
    %126 = vector.broadcast %125 : vector<1x128xf32> to vector<8x128xf32>
    %127 = arith.addf %124, %126 : vector<8x128xf32>
    %cst_112 = arith.constant 0.000000e+00 : f32
    %128 = vector.broadcast %cst_112 : f32 to vector<8x128xf32>
    %129 = arith.maximumf %127, %128 : vector<8x128xf32>
    %c4 = arith.constant 4 : index
    %c0_113 = arith.constant 0 : index
    %130 = vector.load %arg2[%c4, %c0_113] : memref<17x128xf32, #tpu.memory_space<vmem>>, vector<1x128xf32>
    %131 = vector.broadcast %130 : vector<1x128xf32> to vector<8x128xf32>
    %132 = arith.mulf %129, %131 : vector<8x128xf32>
    %c5 = arith.constant 5 : index
    %c0_114 = arith.constant 0 : index
    %133 = vector.load %arg2[%c5, %c0_114] : memref<17x128xf32, #tpu.memory_space<vmem>>, vector<1x128xf32>
    %134 = vector.broadcast %133 : vector<1x128xf32> to vector<8x128xf32>
    %135 = arith.addf %132, %134 : vector<8x128xf32>
    %c4_i32_115 = arith.constant 4 : i32
    %c4_i32_116 = arith.constant 4 : i32
    %c4_i32_117 = arith.constant 4 : i32
    %c0_i32_118 = arith.constant 0 : i32
    %c0_i32_119 = arith.constant 0 : i32
    %136 = tpu.memref_slice %arg1[%c4_i32_115, %c0_i32_118, %c0_i32_119] : memref<9x128x128xbf16, #tpu.memory_space<any>> -> memref<1x128x128xbf16, #tpu.memory_space<any>>
    %137 = tpu.memref_squeeze %136 : memref<1x128x128xbf16, #tpu.memory_space<any>> -> memref<128x128xbf16, #tpu.memory_space<any>>
    %c0_i32_120 = arith.constant 0 : i32
    %c0_i32_121 = arith.constant 0 : i32
    %138 = tpu.memref_slice %arg4[%c4_i32_116, %c0_i32_120, %c0_i32_121] : memref<9x128x128xbf16, #tpu.memory_space<vmem>> -> memref<1x128x128xbf16, #tpu.memory_space<vmem>>
    %139 = tpu.memref_squeeze %138 : memref<1x128x128xbf16, #tpu.memory_space<vmem>> -> memref<128x128xbf16, #tpu.memory_space<vmem>>
    %140 = tpu.memref_slice %arg5[%c4_i32_117] : memref<9x!tpu.dma_semaphore, #tpu.memory_space<semaphore_mem>> -> memref<1x!tpu.dma_semaphore, #tpu.memory_space<semaphore_mem>>
    %141 = tpu.memref_squeeze %140 : memref<1x!tpu.dma_semaphore, #tpu.memory_space<semaphore_mem>> -> memref<!tpu.dma_semaphore, #tpu.memory_space<semaphore_mem>>
    tpu.wait_dma2 semaphore(%141 : memref<!tpu.dma_semaphore, #tpu.memory_space<semaphore_mem>>) src(%137 : memref<128x128xbf16, #tpu.memory_space<any>>) dst(%139 : memref<128x128xbf16, #tpu.memory_space<vmem>>)
    %c4_122 = arith.constant 4 : index
    %c0_123 = arith.constant 0 : index
    %c0_124 = arith.constant 0 : index
    %142 = vector.load %arg4[%c4_122, %c0_123, %c0_124] : memref<9x128x128xbf16, #tpu.memory_space<vmem>>, vector<1x128x128xbf16>
    %143 = vector.shape_cast %142 : vector<1x128x128xbf16> to vector<128x128xbf16>
    %144 = arith.extf %143 : vector<128x128xbf16> to vector<128x128xf32>
    %cst_125 = arith.constant dense<0.000000e+00> : vector<8x128xf32>
    %145 = tpu.matmul %135, %144, %cst_125 {dimension_numbers = #tpu.dot_dimension_numbers<[1], [0], [0], [1], [0, 0, 1, 1], [], []>} : vector<8x128xf32>, vector<128x128xf32>, vector<8x128xf32> -> vector<8x128xf32>
    %c6 = arith.constant 6 : index
    %c0_126 = arith.constant 0 : index
    %146 = vector.load %arg2[%c6, %c0_126] : memref<17x128xf32, #tpu.memory_space<vmem>>, vector<1x128xf32>
    %147 = vector.broadcast %146 : vector<1x128xf32> to vector<8x128xf32>
    %148 = arith.addf %145, %147 : vector<8x128xf32>
    %cst_127 = arith.constant 0.000000e+00 : f32
    %149 = vector.broadcast %cst_127 : f32 to vector<8x128xf32>
    %150 = arith.maximumf %148, %149 : vector<8x128xf32>
    %c7 = arith.constant 7 : index
    %c0_128 = arith.constant 0 : index
    %151 = vector.load %arg2[%c7, %c0_128] : memref<17x128xf32, #tpu.memory_space<vmem>>, vector<1x128xf32>
    %152 = vector.broadcast %151 : vector<1x128xf32> to vector<8x128xf32>
    %153 = arith.mulf %150, %152 : vector<8x128xf32>
    %c8 = arith.constant 8 : index
    %c0_129 = arith.constant 0 : index
    %154 = vector.load %arg2[%c8, %c0_129] : memref<17x128xf32, #tpu.memory_space<vmem>>, vector<1x128xf32>
    %155 = vector.broadcast %154 : vector<1x128xf32> to vector<8x128xf32>
    %156 = arith.addf %153, %155 : vector<8x128xf32>
    %c5_i32_130 = arith.constant 5 : i32
    %c5_i32_131 = arith.constant 5 : i32
    %c5_i32_132 = arith.constant 5 : i32
    %c0_i32_133 = arith.constant 0 : i32
    %c0_i32_134 = arith.constant 0 : i32
    %157 = tpu.memref_slice %arg1[%c5_i32_130, %c0_i32_133, %c0_i32_134] : memref<9x128x128xbf16, #tpu.memory_space<any>> -> memref<1x128x128xbf16, #tpu.memory_space<any>>
    %158 = tpu.memref_squeeze %157 : memref<1x128x128xbf16, #tpu.memory_space<any>> -> memref<128x128xbf16, #tpu.memory_space<any>>
    %c0_i32_135 = arith.constant 0 : i32
    %c0_i32_136 = arith.constant 0 : i32
    %159 = tpu.memref_slice %arg4[%c5_i32_131, %c0_i32_135, %c0_i32_136] : memref<9x128x128xbf16, #tpu.memory_space<vmem>> -> memref<1x128x128xbf16, #tpu.memory_space<vmem>>
    %160 = tpu.memref_squeeze %159 : memref<1x128x128xbf16, #tpu.memory_space<vmem>> -> memref<128x128xbf16, #tpu.memory_space<vmem>>
    %161 = tpu.memref_slice %arg5[%c5_i32_132] : memref<9x!tpu.dma_semaphore, #tpu.memory_space<semaphore_mem>> -> memref<1x!tpu.dma_semaphore, #tpu.memory_space<semaphore_mem>>
    %162 = tpu.memref_squeeze %161 : memref<1x!tpu.dma_semaphore, #tpu.memory_space<semaphore_mem>> -> memref<!tpu.dma_semaphore, #tpu.memory_space<semaphore_mem>>
    tpu.wait_dma2 semaphore(%162 : memref<!tpu.dma_semaphore, #tpu.memory_space<semaphore_mem>>) src(%158 : memref<128x128xbf16, #tpu.memory_space<any>>) dst(%160 : memref<128x128xbf16, #tpu.memory_space<vmem>>)
    %c5_137 = arith.constant 5 : index
    %c0_138 = arith.constant 0 : index
    %c0_139 = arith.constant 0 : index
    %163 = vector.load %arg4[%c5_137, %c0_138, %c0_139] : memref<9x128x128xbf16, #tpu.memory_space<vmem>>, vector<1x128x128xbf16>
    %164 = vector.shape_cast %163 : vector<1x128x128xbf16> to vector<128x128xbf16>
    %165 = arith.extf %164 : vector<128x128xbf16> to vector<128x128xf32>
    %cst_140 = arith.constant dense<0.000000e+00> : vector<8x128xf32>
    %166 = tpu.matmul %156, %165, %cst_140 {dimension_numbers = #tpu.dot_dimension_numbers<[1], [0], [0], [1], [0, 0, 1, 1], [], []>} : vector<8x128xf32>, vector<128x128xf32>, vector<8x128xf32> -> vector<8x128xf32>
    %c9 = arith.constant 9 : index
    %c0_141 = arith.constant 0 : index
    %167 = vector.load %arg2[%c9, %c0_141] : memref<17x128xf32, #tpu.memory_space<vmem>>, vector<1x128xf32>
    %168 = vector.broadcast %167 : vector<1x128xf32> to vector<8x128xf32>
    %169 = arith.addf %166, %168 : vector<8x128xf32>
    %cst_142 = arith.constant 0.000000e+00 : f32
    %170 = vector.broadcast %cst_142 : f32 to vector<8x128xf32>
    %171 = arith.subf %170, %169 : vector<8x128xf32>
    %172 = math.exp %171 : vector<8x128xf32>
    %cst_143 = arith.constant 1.000000e+00 : f32
    %173 = vector.broadcast %cst_143 : f32 to vector<8x128xf32>
    %174 = arith.addf %173, %172 : vector<8x128xf32>
    %cst_144 = arith.constant 1.000000e+00 : f32
    %175 = vector.broadcast %cst_144 : f32 to vector<8x128xf32>
    %176 = arith.divf %175, %174 : vector<8x128xf32>
    %177 = vector.extract_strided_slice %176 {offsets = [0, 32], sizes = [8, 1], strides = [1, 1]} : vector<8x128xf32> to vector<8x1xf32>
    %178 = tpu.iota {dimensions = array<i32: 1>} : vector<8x128xi32>
    %c64_i32 = arith.constant 64 : i32
    %179 = vector.broadcast %c64_i32 : i32 to vector<8x128xi32>
    %180 = arith.cmpi slt, %178, %179 : vector<8x128xi32>
    %cst_145 = arith.constant 1.000000e+00 : f32
    %181 = vector.broadcast %cst_145 : f32 to vector<8x128xf32>
    %182 = vector.shape_cast %177 : vector<8x1xf32> to vector<8x1xf32>
    %183 = vector.broadcast %182 : vector<8x1xf32> to vector<8x128xf32>
    %184 = arith.select %180, %181, %183 : vector<8x128xi1>, vector<8x128xf32>
    %c6_i32_146 = arith.constant 6 : i32
    %c6_i32_147 = arith.constant 6 : i32
    %c6_i32_148 = arith.constant 6 : i32
    %c0_i32_149 = arith.constant 0 : i32
    %c0_i32_150 = arith.constant 0 : i32
    %185 = tpu.memref_slice %arg1[%c6_i32_146, %c0_i32_149, %c0_i32_150] : memref<9x128x128xbf16, #tpu.memory_space<any>> -> memref<1x128x128xbf16, #tpu.memory_space<any>>
    %186 = tpu.memref_squeeze %185 : memref<1x128x128xbf16, #tpu.memory_space<any>> -> memref<128x128xbf16, #tpu.memory_space<any>>
    %c0_i32_151 = arith.constant 0 : i32
    %c0_i32_152 = arith.constant 0 : i32
    %187 = tpu.memref_slice %arg4[%c6_i32_147, %c0_i32_151, %c0_i32_152] : memref<9x128x128xbf16, #tpu.memory_space<vmem>> -> memref<1x128x128xbf16, #tpu.memory_space<vmem>>
    %188 = tpu.memref_squeeze %187 : memref<1x128x128xbf16, #tpu.memory_space<vmem>> -> memref<128x128xbf16, #tpu.memory_space<vmem>>
    %189 = tpu.memref_slice %arg5[%c6_i32_148] : memref<9x!tpu.dma_semaphore, #tpu.memory_space<semaphore_mem>> -> memref<1x!tpu.dma_semaphore, #tpu.memory_space<semaphore_mem>>
    %190 = tpu.memref_squeeze %189 : memref<1x!tpu.dma_semaphore, #tpu.memory_space<semaphore_mem>> -> memref<!tpu.dma_semaphore, #tpu.memory_space<semaphore_mem>>
    tpu.wait_dma2 semaphore(%190 : memref<!tpu.dma_semaphore, #tpu.memory_space<semaphore_mem>>) src(%186 : memref<128x128xbf16, #tpu.memory_space<any>>) dst(%188 : memref<128x128xbf16, #tpu.memory_space<vmem>>)
    %c6_153 = arith.constant 6 : index
    %c0_154 = arith.constant 0 : index
    %c0_155 = arith.constant 0 : index
    %191 = vector.load %arg4[%c6_153, %c0_154, %c0_155] : memref<9x128x128xbf16, #tpu.memory_space<vmem>>, vector<1x128x128xbf16>
    %192 = vector.shape_cast %191 : vector<1x128x128xbf16> to vector<128x128xbf16>
    %193 = arith.extf %192 : vector<128x128xbf16> to vector<128x128xf32>
    %cst_156 = arith.constant dense<0.000000e+00> : vector<8x128xf32>
    %194 = tpu.matmul %114, %193, %cst_156 {dimension_numbers = #tpu.dot_dimension_numbers<[1], [0], [0], [1], [0, 0, 1, 1], [], []>} : vector<8x128xf32>, vector<128x128xf32>, vector<8x128xf32> -> vector<8x128xf32>
    %195 = arith.mulf %194, %184 : vector<8x128xf32>
    %c10 = arith.constant 10 : index
    %c0_157 = arith.constant 0 : index
    %196 = vector.load %arg2[%c10, %c0_157] : memref<17x128xf32, #tpu.memory_space<vmem>>, vector<1x128xf32>
    %197 = vector.broadcast %196 : vector<1x128xf32> to vector<8x128xf32>
    %198 = arith.addf %195, %197 : vector<8x128xf32>
    %cst_158 = arith.constant 0.000000e+00 : f32
    %199 = vector.broadcast %cst_158 : f32 to vector<8x128xf32>
    %200 = arith.subf %199, %198 : vector<8x128xf32>
    %201 = math.exp %200 : vector<8x128xf32>
    %cst_159 = arith.constant 1.000000e+00 : f32
    %202 = vector.broadcast %cst_159 : f32 to vector<8x128xf32>
    %203 = arith.addf %202, %201 : vector<8x128xf32>
    %cst_160 = arith.constant 1.000000e+00 : f32
    %204 = vector.broadcast %cst_160 : f32 to vector<8x128xf32>
    %205 = arith.divf %204, %203 : vector<8x128xf32>
    %cst_161 = arith.constant 0.000000e+00 : f32
    %206 = vector.broadcast %cst_161 : f32 to vector<8x128xf32>
    %207 = arith.maximumf %198, %206 : vector<8x128xf32>
    %c11 = arith.constant 11 : index
    %c0_162 = arith.constant 0 : index
    %208 = vector.load %arg2[%c11, %c0_162] : memref<17x128xf32, #tpu.memory_space<vmem>>, vector<1x128xf32>
    %209 = vector.broadcast %208 : vector<1x128xf32> to vector<8x128xf32>
    %210 = arith.mulf %207, %209 : vector<8x128xf32>
    %c12 = arith.constant 12 : index
    %c0_163 = arith.constant 0 : index
    %211 = vector.load %arg2[%c12, %c0_163] : memref<17x128xf32, #tpu.memory_space<vmem>>, vector<1x128xf32>
    %212 = vector.broadcast %211 : vector<1x128xf32> to vector<8x128xf32>
    %213 = arith.addf %210, %212 : vector<8x128xf32>
    %214 = arith.select %180, %205, %213 : vector<8x128xi1>, vector<8x128xf32>
    %c7_i32_164 = arith.constant 7 : i32
    %c7_i32_165 = arith.constant 7 : i32
    %c7_i32_166 = arith.constant 7 : i32
    %c0_i32_167 = arith.constant 0 : i32
    %c0_i32_168 = arith.constant 0 : i32
    %215 = tpu.memref_slice %arg1[%c7_i32_164, %c0_i32_167, %c0_i32_168] : memref<9x128x128xbf16, #tpu.memory_space<any>> -> memref<1x128x128xbf16, #tpu.memory_space<any>>
    %216 = tpu.memref_squeeze %215 : memref<1x128x128xbf16, #tpu.memory_space<any>> -> memref<128x128xbf16, #tpu.memory_space<any>>
    %c0_i32_169 = arith.constant 0 : i32
    %c0_i32_170 = arith.constant 0 : i32
    %217 = tpu.memref_slice %arg4[%c7_i32_165, %c0_i32_169, %c0_i32_170] : memref<9x128x128xbf16, #tpu.memory_space<vmem>> -> memref<1x128x128xbf16, #tpu.memory_space<vmem>>
    %218 = tpu.memref_squeeze %217 : memref<1x128x128xbf16, #tpu.memory_space<vmem>> -> memref<128x128xbf16, #tpu.memory_space<vmem>>
    %219 = tpu.memref_slice %arg5[%c7_i32_166] : memref<9x!tpu.dma_semaphore, #tpu.memory_space<semaphore_mem>> -> memref<1x!tpu.dma_semaphore, #tpu.memory_space<semaphore_mem>>
    %220 = tpu.memref_squeeze %219 : memref<1x!tpu.dma_semaphore, #tpu.memory_space<semaphore_mem>> -> memref<!tpu.dma_semaphore, #tpu.memory_space<semaphore_mem>>
    tpu.wait_dma2 semaphore(%220 : memref<!tpu.dma_semaphore, #tpu.memory_space<semaphore_mem>>) src(%216 : memref<128x128xbf16, #tpu.memory_space<any>>) dst(%218 : memref<128x128xbf16, #tpu.memory_space<vmem>>)
    %c7_171 = arith.constant 7 : index
    %c0_172 = arith.constant 0 : index
    %c0_173 = arith.constant 0 : index
    %221 = vector.load %arg4[%c7_171, %c0_172, %c0_173] : memref<9x128x128xbf16, #tpu.memory_space<vmem>>, vector<1x128x128xbf16>
    %222 = vector.shape_cast %221 : vector<1x128x128xbf16> to vector<128x128xbf16>
    %223 = arith.extf %222 : vector<128x128xbf16> to vector<128x128xf32>
    %cst_174 = arith.constant dense<0.000000e+00> : vector<8x128xf32>
    %224 = tpu.matmul %214, %223, %cst_174 {dimension_numbers = #tpu.dot_dimension_numbers<[1], [0], [0], [1], [0, 0, 1, 1], [], []>} : vector<8x128xf32>, vector<128x128xf32>, vector<8x128xf32> -> vector<8x128xf32>
    %c13 = arith.constant 13 : index
    %c0_175 = arith.constant 0 : index
    %225 = vector.load %arg2[%c13, %c0_175] : memref<17x128xf32, #tpu.memory_space<vmem>>, vector<1x128xf32>
    %226 = vector.broadcast %225 : vector<1x128xf32> to vector<8x128xf32>
    %227 = arith.addf %224, %226 : vector<8x128xf32>
    %cst_176 = arith.constant 0.000000e+00 : f32
    %228 = vector.broadcast %cst_176 : f32 to vector<8x128xf32>
    %229 = arith.subf %228, %227 : vector<8x128xf32>
    %230 = math.exp %229 : vector<8x128xf32>
    %cst_177 = arith.constant 1.000000e+00 : f32
    %231 = vector.broadcast %cst_177 : f32 to vector<8x128xf32>
    %232 = arith.addf %231, %230 : vector<8x128xf32>
    %cst_178 = arith.constant 1.000000e+00 : f32
    %233 = vector.broadcast %cst_178 : f32 to vector<8x128xf32>
    %234 = arith.divf %233, %232 : vector<8x128xf32>
    %cst_179 = arith.constant 0.000000e+00 : f32
    %235 = vector.broadcast %cst_179 : f32 to vector<8x128xf32>
    %236 = arith.maximumf %227, %235 : vector<8x128xf32>
    %c14 = arith.constant 14 : index
    %c0_180 = arith.constant 0 : index
    %237 = vector.load %arg2[%c14, %c0_180] : memref<17x128xf32, #tpu.memory_space<vmem>>, vector<1x128xf32>
    %238 = vector.broadcast %237 : vector<1x128xf32> to vector<8x128xf32>
    %239 = arith.mulf %236, %238 : vector<8x128xf32>
    %c15 = arith.constant 15 : index
    %c0_181 = arith.constant 0 : index
    %240 = vector.load %arg2[%c15, %c0_181] : memref<17x128xf32, #tpu.memory_space<vmem>>, vector<1x128xf32>
    %241 = vector.broadcast %240 : vector<1x128xf32> to vector<8x128xf32>
    %242 = arith.addf %239, %241 : vector<8x128xf32>
    %243 = arith.select %180, %234, %242 : vector<8x128xi1>, vector<8x128xf32>
    %c8_i32_182 = arith.constant 8 : i32
    %c8_i32_183 = arith.constant 8 : i32
    %c8_i32_184 = arith.constant 8 : i32
    %c0_i32_185 = arith.constant 0 : i32
    %c0_i32_186 = arith.constant 0 : i32
    %244 = tpu.memref_slice %arg1[%c8_i32_182, %c0_i32_185, %c0_i32_186] : memref<9x128x128xbf16, #tpu.memory_space<any>> -> memref<1x128x128xbf16, #tpu.memory_space<any>>
    %245 = tpu.memref_squeeze %244 : memref<1x128x128xbf16, #tpu.memory_space<any>> -> memref<128x128xbf16, #tpu.memory_space<any>>
    %c0_i32_187 = arith.constant 0 : i32
    %c0_i32_188 = arith.constant 0 : i32
    %246 = tpu.memref_slice %arg4[%c8_i32_183, %c0_i32_187, %c0_i32_188] : memref<9x128x128xbf16, #tpu.memory_space<vmem>> -> memref<1x128x128xbf16, #tpu.memory_space<vmem>>
    %247 = tpu.memref_squeeze %246 : memref<1x128x128xbf16, #tpu.memory_space<vmem>> -> memref<128x128xbf16, #tpu.memory_space<vmem>>
    %248 = tpu.memref_slice %arg5[%c8_i32_184] : memref<9x!tpu.dma_semaphore, #tpu.memory_space<semaphore_mem>> -> memref<1x!tpu.dma_semaphore, #tpu.memory_space<semaphore_mem>>
    %249 = tpu.memref_squeeze %248 : memref<1x!tpu.dma_semaphore, #tpu.memory_space<semaphore_mem>> -> memref<!tpu.dma_semaphore, #tpu.memory_space<semaphore_mem>>
    tpu.wait_dma2 semaphore(%249 : memref<!tpu.dma_semaphore, #tpu.memory_space<semaphore_mem>>) src(%245 : memref<128x128xbf16, #tpu.memory_space<any>>) dst(%247 : memref<128x128xbf16, #tpu.memory_space<vmem>>)
    %c8_189 = arith.constant 8 : index
    %c0_190 = arith.constant 0 : index
    %c0_191 = arith.constant 0 : index
    %250 = vector.load %arg4[%c8_189, %c0_190, %c0_191] : memref<9x128x128xbf16, #tpu.memory_space<vmem>>, vector<1x128x128xbf16>
    %251 = vector.shape_cast %250 : vector<1x128x128xbf16> to vector<128x128xbf16>
    %252 = arith.extf %251 : vector<128x128xbf16> to vector<128x128xf32>
    %cst_192 = arith.constant dense<0.000000e+00> : vector<8x128xf32>
    %253 = tpu.matmul %243, %252, %cst_192 {dimension_numbers = #tpu.dot_dimension_numbers<[1], [0], [0], [1], [0, 0, 1, 1], [], []>} : vector<8x128xf32>, vector<128x128xf32>, vector<8x128xf32> -> vector<8x128xf32>
    %c16 = arith.constant 16 : index
    %c0_193 = arith.constant 0 : index
    %254 = vector.load %arg2[%c16, %c0_193] : memref<17x128xf32, #tpu.memory_space<vmem>>, vector<1x128xf32>
    %255 = vector.broadcast %254 : vector<1x128xf32> to vector<8x128xf32>
    %256 = arith.addf %253, %255 : vector<8x128xf32>
    %cst_194 = arith.constant 0.000000e+00 : f32
    %257 = vector.broadcast %cst_194 : f32 to vector<8x128xf32>
    %258 = arith.subf %257, %256 : vector<8x128xf32>
    %259 = math.exp %258 : vector<8x128xf32>
    %cst_195 = arith.constant 1.000000e+00 : f32
    %260 = vector.broadcast %cst_195 : f32 to vector<8x128xf32>
    %261 = arith.addf %260, %259 : vector<8x128xf32>
    %cst_196 = arith.constant 1.000000e+00 : f32
    %262 = vector.broadcast %cst_196 : f32 to vector<8x128xf32>
    %263 = arith.divf %262, %261 : vector<8x128xf32>
    %c32_i32 = arith.constant 32 : i32
    %264 = vector.broadcast %c32_i32 : i32 to vector<8x128xi32>
    %265 = arith.cmpi eq, %178, %264 : vector<8x128xi32>
    %c33_i32 = arith.constant 33 : i32
    %266 = vector.broadcast %c33_i32 : i32 to vector<8x128xi32>
    %267 = arith.cmpi eq, %178, %266 : vector<8x128xi32>
    %268 = arith.ori %265, %267 : vector<8x128xi1>
    %269 = arith.select %268, %176, %263 : vector<8x128xi1>, vector<8x128xf32>
    %c0_197 = arith.constant 0 : index
    %c0_198 = arith.constant 0 : index
    %270 = vector.load %arg3[%c0_197, %c0_198] : memref<8x128xf32, #tpu.memory_space<vmem>>, vector<8x128xf32>
    tpu.vector_store %arg3[%c0_197, %c0_198], %269 {strides = array<i32>} : memref<8x128xf32, #tpu.memory_space<vmem>>, vector<8x128xf32>,
    return
  }
}

</mosaic_0001>

<llo_original>
// kernel: complete_model_forward.1
$region0: #{complete_model_forward.1}
  #allocation0 [shape = 'u32[]', space=smem, size = 0x4, offset = 0x4, fixed_abs, tag = 'smem constant byte address 0x4 - core index']
  #allocation1 [shape = 'u32[144,128]{1,0:T(1,128)}', space=vmem, size = 0x12000, scoped, tag = 'internal scratch']
  #allocation2 [shape = 'bf16[9,128,128]{2,1,0:T(16,128)(2,1)}', space=vmem, size = 0x48000, scoped, tag = 'scratch operand']
  #allocation3 [shape = 's32[9]{0}', space=sflag, size = 0x24, scoped, tag = 'scratch operand']
  #allocation8 [shape = 's32[]', space=sflag, size = 0x4, offset = 0, fixed_abs, tag = 'sflag constant byte address 0x0 - dummy sync flag']
  #allocation9 [shape = 's32[]', space=sflag, size = 0x4, offset = 0, fixed_abs, tag = 'sflag constant byte address 0x0 - dummy sync flag']
  #allocation10 [shape = 'u32[]', space=smem, size = 0x4, offset = 0x44, fixed_abs, tag = 'smem constant byte address 0x44 - assertion arg 0']
  #allocation11 [shape = 'u32[]', space=smem, size = 0x4, offset = 0x48, fixed_abs, tag = 'smem constant byte address 0x48 - assertion arg 1']
  #allocation12 [shape = 's32[]', space=sflag, size = 0x4, offset = 0, fixed_abs, tag = 'sflag constant byte address 0x0 - dummy sync flag']
  #allocation13 [shape = 's32[]', space=sflag, size = 0x4, offset = 0, fixed_abs, tag = 'sflag constant byte address 0x0 - dummy sync flag']
  #allocation14 [shape = 's32[]', space=sflag, size = 0x4, offset = 0, fixed_abs, tag = 'sflag constant byte address 0x0 - dummy sync flag']
  #allocation15 [shape = 's32[]', space=sflag, size = 0x4, offset = 0, fixed_abs, tag = 'sflag constant byte address 0x0 - dummy sync flag']
  #allocation16 [shape = 's32[]', space=sflag, size = 0x4, offset = 0, fixed_abs, tag = 'sflag constant byte address 0x0 - dummy sync flag']
  #allocation17 [shape = 's32[]', space=sflag, size = 0x4, offset = 0, fixed_abs, tag = 'sflag constant byte address 0x0 - dummy sync flag']
  #allocation18 [shape = 's32[]', space=sflag, size = 0x4, offset = 0, fixed_abs, tag = 'sflag constant byte address 0x0 - dummy sync flag']
  #allocation19 [shape = 's32[]', space=sflag, size = 0x4, offset = 0, fixed_abs, tag = 'sflag constant byte address 0x0 - dummy sync flag']
  #allocation20 [shape = 's32[]', space=sflag, size = 0x4, offset = 0, fixed_abs, tag = 'sflag constant byte address 0x0 - dummy sync flag']
  #allocation21 [shape = 's32[]', space=sflag, size = 0x4, offset = 0, fixed_abs, tag = 'sflag constant byte address 0x0 - dummy sync flag']
  #allocation22 [shape = 's32[]', space=sflag, size = 0x4, offset = 0, fixed_abs, tag = 'sflag constant byte address 0x0 - dummy sync flag']
  #allocation23 [shape = 's32[]', space=sflag, size = 0x4, offset = 0, fixed_abs, tag = 'sflag constant byte address 0x0 - dummy sync flag']
  #allocation24 [shape = 's32[]', space=sflag, size = 0x4, offset = 0, fixed_abs, tag = 'sflag constant byte address 0x0 - dummy sync flag']
  #allocation25 [shape = 's32[]', space=sflag, size = 0x4, offset = 0, fixed_abs, tag = 'sflag constant byte address 0x0 - dummy sync flag']
  #allocation26 [shape = 's32[]', space=sflag, size = 0x4, offset = 0, fixed_abs, tag = 'sflag constant byte address 0x0 - dummy sync flag']
  #allocation27 [shape = 's32[]', space=sflag, size = 0x4, offset = 0, fixed_abs, tag = 'sflag constant byte address 0x0 - dummy sync flag']
  %s0 = inlined_call_operand.hbm [shape: f32[8,32], index: 0, kind: input, shape index: {}]
  %s1 = inlined_call_operand.hbm [shape: bf16[9,128,128], index: 1, kind: input, shape index: {}]
  %s2 = inlined_call_operand.hbm [shape: f32[17,128], index: 2, kind: input, shape index: {}]
  %s3 = inlined_call_operand.vmem [shape: f32[8,128], index: 3, kind: output, shape index: {}]
  %s4 = sld [smem:[#allocation0]]
  $region62: #{complete_model_forward.1} parent=0
    _
  %s6 = ssub.s32 1, %s4
  %s7 = scalar_select 0, %s6, %s4
  $region1: #{complete_model_forward.1} parent=0
    #allocation4 [shape = 'u8[4096]{0}', space=vmem, size = 0x1000, scoped, tag = 'input window, operand 0, single buffered']
    #allocation5 [shape = 's32[1]{0}', space=sflag, size = 0x4, scoped, tag = 'scoped memory for complete_model_forward.1']
    #allocation6 [shape = 'u8[12288]{0}', space=vmem, size = 0x3000, scoped, tag = 'input window, operand 2, single buffered']
    #allocation7 [shape = 's32[1]{0}', space=sflag, size = 0x4, scoped, tag = 'scoped memory for complete_model_forward.1']
    %8 = vsyncpa [#allocation5], 0
    %9 = vsyncpa [#allocation7], 0
    // Predicated region
    $region2: #{complete_model_forward.1} parent=1 // pred_check
      _
    $region3: #{complete_model_forward.1} parent=1 // pred_check_branch
      %11 = sbr.rel (0) target = $region5
    $region4: #{complete_model_forward.1} parent=1 // pred_region
      %s13 = ssub.s32 128, 128
      %14 = vsyncadd [#allocation5], %s13
      %s16 = sshll.u32 [#allocation4], 4
      %s17 = int_to_ptr.vmem [resolvable:$true] %s16
      %19 = dma.hbm_to_vmem [thread:$0]  %s0, 128, %s17, [#allocation5]
    $region5: #{complete_model_forward.1} parent=1 // pred_fallthru
      _
    // Predicated region
    $region6: #{complete_model_forward.1} parent=1 // pred_check
      _
    $region7: #{complete_model_forward.1} parent=1 // pred_check_branch
      %21 = sbr.rel (0) target = $region9
    $region8: #{complete_model_forward.1} parent=1 // pred_region
      %s23 = ssub.s32 384, 384
      %24 = vsyncadd [#allocation7], %s23
      %s25 = sshll.u32 [#allocation6], 4
      %s26 = int_to_ptr.vmem [resolvable:$true] %s25
      %31 = dma.hbm_to_vmem [thread:$0]  %s2, 384, %s26, [#allocation7], 128, 128, 8
    $region9: #{complete_model_forward.1} parent=1 // pred_fallthru
      _
    // Predicated region
    $region10: #{complete_model_forward.1} parent=1 // pred_check
      _
    $region11: #{complete_model_forward.1} parent=1 // pred_check_branch
      %33 = sbr.rel (0) target = $region13
    $region12: #{complete_model_forward.1} parent=1 // pred_region
      %34 = dma.done [#allocation5], 128
    $region13: #{complete_model_forward.1} parent=1 // pred_fallthru
      _
    // Predicated region
    $region14: #{complete_model_forward.1} parent=1 // pred_check
      _
    $region15: #{complete_model_forward.1} parent=1 // pred_check_branch
      %36 = sbr.rel (0) target = $region17
    $region16: #{complete_model_forward.1} parent=1 // pred_region
      %37 = dma.done [#allocation7], 384
    $region17: #{complete_model_forward.1} parent=1 // pred_fallthru
      _
    // Predicated region
    $region18: #{complete_model_forward.1} parent=1 // pred_check
      _
    $region19: #{complete_model_forward.1} parent=1 // pred_check_branch
      %39 = sbr.rel target = $region21
    $region20: #{complete_model_forward.1} parent=1 // pred_region
      %40 = sst [smem:[#allocation10]] [#allocation9]
      %41 = sst [smem:[#allocation11]] [#allocation8]
    $region21: #{complete_model_forward.1} parent=1 // pred_fallthru
      _
    %43 = shalt.err (0)
    %s45 = sshll.u32 [#allocation2], 4
    %s46 = int_to_ptr.vmem [resolvable:$true] %s45
    %48 = dma.hbm_to_vmem [thread:$0]  %s1, 1024, %s46, [#allocation3]
    %s49 = scalar_lea.hbm %s1, 1024
    %s50 = scalar_lea.vmem [#allocation2], 64
    %s51 = scalar_lea.sflag [#allocation3], 1
    // Predicated region
    $region22: #{complete_model_forward.1} parent=1 // pred_check
      _
    $region23: #{complete_model_forward.1} parent=1 // pred_check_branch
      %53 = sbr.rel target = $region25
    $region24: #{complete_model_forward.1} parent=1 // pred_region
      %54 = sst [smem:[#allocation10]] [#allocation13]
      %55 = sst [smem:[#allocation11]] [#allocation12]
    $region25: #{complete_model_forward.1} parent=1 // pred_fallthru
      _
    %57 = shalt.err (0)
    %s59 = sshll.u32 %s50, 4
    %s60 = int_to_ptr.vmem [resolvable:$true] %s59
    %62 = dma.hbm_to_vmem [thread:$0]  %s49, 1024, %s60, %s51
    %s63 = scalar_lea.hbm %s1, 2048
    %s64 = scalar_lea.vmem [#allocation2], 128
    %s65 = scalar_lea.sflag [#allocation3], 2
    // Predicated region
    $region26: #{complete_model_forward.1} parent=1 // pred_check
      _
    $region27: #{complete_model_forward.1} parent=1 // pred_check_branch
      %67 = sbr.rel target = $region29
    $region28: #{complete_model_forward.1} parent=1 // pred_region
      %68 = sst [smem:[#allocation10]] [#allocation15]
      %69 = sst [smem:[#allocation11]] [#allocation14]
    $region29: #{complete_model_forward.1} parent=1 // pred_fallthru
      _
    %71 = shalt.err (0)
    %s73 = sshll.u32 %s64, 4
    %s74 = int_to_ptr.vmem [resolvable:$true] %s73
    %76 = dma.hbm_to_vmem [thread:$0]  %s63, 1024, %s74, %s65
    %s77 = scalar_lea.hbm %s1, 3072
    %s78 = scalar_lea.vmem [#allocation2], 192
    %s79 = scalar_lea.sflag [#allocation3], 3
    // Predicated region
    $region30: #{complete_model_forward.1} parent=1 // pred_check
      _
    $region31: #{complete_model_forward.1} parent=1 // pred_check_branch
      %81 = sbr.rel target = $region33
    $region32: #{complete_model_forward.1} parent=1 // pred_region
      %82 = sst [smem:[#allocation10]] [#allocation17]
      %83 = sst [smem:[#allocation11]] [#allocation16]
    $region33: #{complete_model_forward.1} parent=1 // pred_fallthru
      _
    %85 = shalt.err (0)
    %s87 = sshll.u32 %s78, 4
    %s88 = int_to_ptr.vmem [resolvable:$true] %s87
    %90 = dma.hbm_to_vmem [thread:$0]  %s77, 1024, %s88, %s79
    %s91 = scalar_lea.hbm %s1, 4096
    %s92 = scalar_lea.vmem [#allocation2], 256
    %s93 = scalar_lea.sflag [#allocation3], 4
    // Predicated region
    $region34: #{complete_model_forward.1} parent=1 // pred_check
      _
    $region35: #{complete_model_forward.1} parent=1 // pred_check_branch
      %95 = sbr.rel target = $region37
    $region36: #{complete_model_forward.1} parent=1 // pred_region
      %96 = sst [smem:[#allocation10]] [#allocation19]
      %97 = sst [smem:[#allocation11]] [#allocation18]
    $region37: #{complete_model_forward.1} parent=1 // pred_fallthru
      _
    %99 = shalt.err (0)
    %s101 = sshll.u32 %s92, 4
    %s102 = int_to_ptr.vmem [resolvable:$true] %s101
    %104 = dma.hbm_to_vmem [thread:$0]  %s91, 1024, %s102, %s93
    %s105 = scalar_lea.hbm %s1, 5120
    %s106 = scalar_lea.vmem [#allocation2], 320
    %s107 = scalar_lea.sflag [#allocation3], 5
    // Predicated region
    $region38: #{complete_model_forward.1} parent=1 // pred_check
      _
    $region39: #{complete_model_forward.1} parent=1 // pred_check_branch
      %109 = sbr.rel target = $region41
    $region40: #{complete_model_forward.1} parent=1 // pred_region
      %110 = sst [smem:[#allocation10]] [#allocation21]
      %111 = sst [smem:[#allocation11]] [#allocation20]
    $region41: #{complete_model_forward.1} parent=1 // pred_fallthru
      _
    %113 = shalt.err (0)
    %s115 = sshll.u32 %s106, 4
    %s116 = int_to_ptr.vmem [resolvable:$true] %s115
    %118 = dma.hbm_to_vmem [thread:$0]  %s105, 1024, %s116, %s107
    %s119 = scalar_lea.hbm %s1, 6144
    %s120 = scalar_lea.vmem [#allocation2], 384
    %s121 = scalar_lea.sflag [#allocation3], 6
    // Predicated region
    $region42: #{complete_model_forward.1} parent=1 // pred_check
      _
    $region43: #{complete_model_forward.1} parent=1 // pred_check_branch
      %123 = sbr.rel target = $region45
    $region44: #{complete_model_forward.1} parent=1 // pred_region
      %124 = sst [smem:[#allocation10]] [#allocation23]
      %125 = sst [smem:[#allocation11]] [#allocation22]
    $region45: #{complete_model_forward.1} parent=1 // pred_fallthru
      _
    %127 = shalt.err (0)
    %s129 = sshll.u32 %s120, 4
    %s130 = int_to_ptr.vmem [resolvable:$true] %s129
    %132 = dma.hbm_to_vmem [thread:$0]  %s119, 1024, %s130, %s121
    %s133 = scalar_lea.hbm %s1, 7168
    %s134 = scalar_lea.vmem [#allocation2], 448
    %s135 = scalar_lea.sflag [#allocation3], 7
    // Predicated region
    $region46: #{complete_model_forward.1} parent=1 // pred_check
      _
    $region47: #{complete_model_forward.1} parent=1 // pred_check_branch
      %137 = sbr.rel target = $region49
    $region48: #{complete_model_forward.1} parent=1 // pred_region
      %138 = sst [smem:[#allocation10]] [#allocation25]
      %139 = sst [smem:[#allocation11]] [#allocation24]
    $region49: #{complete_model_forward.1} parent=1 // pred_fallthru
      _
    %141 = shalt.err (0)
    %s143 = sshll.u32 %s134, 4
    %s144 = int_to_ptr.vmem [resolvable:$true] %s143
    %146 = dma.hbm_to_vmem [thread:$0]  %s133, 1024, %s144, %s135
    %s147 = scalar_lea.hbm %s1, 8192
    %s148 = scalar_lea.vmem [#allocation2], 512
    %s149 = scalar_lea.sflag [#allocation3], 8
    // Predicated region
    $region50: #{complete_model_forward.1} parent=1 // pred_check
      _
    $region51: #{complete_model_forward.1} parent=1 // pred_check_branch
      %151 = sbr.rel target = $region53
    $region52: #{complete_model_forward.1} parent=1 // pred_region
      %152 = sst [smem:[#allocation10]] [#allocation27]
      %153 = sst [smem:[#allocation11]] [#allocation26]
    $region53: #{complete_model_forward.1} parent=1 // pred_fallthru
      _
    %155 = shalt.err (0)
    %s157 = sshll.u32 %s148, 4
    %s158 = int_to_ptr.vmem [resolvable:$true] %s157
    %160 = dma.hbm_to_vmem [thread:$0]  %s147, 1024, %s158, %s149
    %v161 = vld [vmem:[#allocation4] sm:$0xff]
    %s162 = smul.u32 4, 16
    %s163 = smul.u32 %s162, 1
    %s164 = sshll.u32 %s163, 4
    %165 = dma.done [#allocation3], %s164
    %v166 = vld [vmem:[#allocation2] sm:$0xff]
    %v167 = vld [vmem:[#allocation2 + $0x8] sm:$0xff]
    %v168 = vunpack.c.l.bf16 %v166
    %v169 = vunpack.c.h.bf16 %v166
    %v170 = vunpack.c.l.bf16 %v167
    %v171 = vunpack.c.h.bf16 %v167
    %v172 = vld [vmem:[#allocation6] sm:$0x1]
    %v173 = vlaneseq
    %v174 = vshrl.u32 %v173, 7
    %v175 = vsub.s32 0, %v174
    %v176 = vrot.slane %v172, %v175
    %vm177 = vcmask 261120
    %v179 = vsel %vm177, %v161, 0
    %181 = vmatprep.subr.mxu0 0.0
    %182 = vmatpush1.msra.mxu0 %v168
    %183 = vmatprep.subr.mxu0 0.0
    %184 = vmatpush1.msra.mxu0 %v169
    %185 = vmatprep.subr.mxu0 0.0
    %186 = vmatpush1.msra.mxu0 %v170
    %187 = vmatprep.subr.mxu0 0.0
    %188 = vmatpush1.msra.mxu0 %v171
    %189 = vmatprep.subr.mxu0 0.0
    %190 = vmatpush1.msra.mxu0 0.0
    %191 = vmatprep.subr.mxu0 0.0
    %192 = vmatpush1.msra.mxu0 0.0
    %193 = vmatprep.subr.mxu0 0.0
    %194 = vmatpush1.msra.mxu0 0.0
    %195 = vmatprep.subr.mxu0 0.0
    %196 = vmatpush1.msra.mxu0 0.0
    %197 = vmatprep.subr.mxu0 0.0
    %198 = vmatpush1.msra.mxu0 0.0
    %199 = vmatprep.subr.mxu0 0.0
    %200 = vmatpush1.msra.mxu0 0.0
    %201 = vmatprep.subr.mxu0 0.0
    %202 = vmatpush1.msra.mxu0 0.0
    %203 = vmatprep.subr.mxu0 0.0
    %204 = vmatpush1.msra.mxu0 0.0
    %205 = vmatprep.subr.mxu0 0.0
    %206 = vmatpush1.msra.mxu0 0.0
    %207 = vmatprep.subr.mxu0 0.0
    %208 = vmatpush1.msra.mxu0 0.0
    %209 = vmatprep.subr.mxu0 0.0
    %210 = vmatpush1.msra.mxu0 0.0
    %211 = vmatprep.subr.mxu0 0.0
    %212 = vmatpush1.msra.mxu0 0.0
    %213 = vmatprep.subr.mxu0 0.0
    %214 = vmatpush1.msra.mxu0 0.0
    %215 = vmatprep.subr.mxu0 0.0
    %216 = vmatpush1.msra.mxu0 0.0
    %217 = vmatprep.subr.mxu0 0.0
    %218 = vmatpush1.msra.mxu0 0.0
    %219 = vmatprep.subr.mxu0 0.0
    %220 = vmatpush1.msra.mxu0 0.0
    %221 = vmatprep.subr.mxu0 0.0
    %222 = vmatpush1.msra.mxu0 0.0
    %223 = vmatprep.subr.mxu0 0.0
    %224 = vmatpush1.msra.mxu0 0.0
    %225 = vmatprep.subr.mxu0 0.0
    %226 = vmatpush1.msra.mxu0 0.0
    %227 = vmatprep.subr.mxu0 0.0
    %228 = vmatpush1.msra.mxu0 0.0
    %229 = vmatprep.subr.mxu0 0.0
    %230 = vmatpush1.msra.mxu0 0.0
    %231 = vmatprep.subr.mxu0 0.0
    %232 = vmatpush1.msra.mxu0 0.0
    %233 = vmatprep.subr.mxu0 0.0
    %234 = vmatpush1.msra.mxu0 0.0
    %235 = vmatprep.subr.mxu0 0.0
    %236 = vmatpush1.msra.mxu0 0.0
    %237 = vmatprep.subr.mxu0 0.0
    %238 = vmatpush1.msra.mxu0 0.0
    %239 = vmatprep.subr.mxu0 0.0
    %240 = vmatpush1.msra.mxu0 0.0
    %241 = vmatprep.subr.mxu0 0.0
    %242 = vmatpush1.msra.mxu0 0.0
    %243 = vmatprep.subr.mxu0 0.0
    %244 = vmatpush1.msra.mxu0 0.0
    %245 = vmatprep.mubr.f32.mxu0 0.0
    %246 = vmatmul.mubr.f32.gmra.mrb[0].mxu0 %v179
    %v247 = vpop.f32.mrb[0].mxu0
    %v248 = vadd.f32 %v176, %v247
    %v249 = vpop.f32.mrb[0].mxu0
    %250 = vdwg.mxu0
    %v251 = vsub.f32 0.0, %v248
    %v252 = vmul.f32 %v251, 1.442695
    %v253 = vpow.pop %v252
    %v254 = vadd.f32 %v253, 1.0
    %v255 = vrcp.pop %v254
    %v256 = vmul.f32 1.0, %v255
    %s257 = sshll.u32 %s163, 4
    %258 = dma.done %s51, %s257
    %v259 = vld [vmem:[%s50] sm:$0xff]
    %v260 = vld [vmem:[%s50 + $0x8] sm:$0xff]
    %v261 = vld [vmem:[%s50 + $0x10] sm:$0xff]
    %v262 = vld [vmem:[%s50 + $0x18] sm:$0xff]
    %v263 = vld [vmem:[%s50 + $0x20] sm:$0xff]
    %v264 = vld [vmem:[%s50 + $0x28] sm:$0xff]
    %v265 = vld [vmem:[%s50 + $0x30] sm:$0xff]
    %v266 = vld [vmem:[%s50 + $0x38] sm:$0xff]
    %v267 = vunpack.c.l.bf16 %v259
    %v268 = vunpack.c.h.bf16 %v259
    %v269 = vunpack.c.l.bf16 %v260
    %v270 = vunpack.c.h.bf16 %v260
    %v271 = vunpack.c.l.bf16 %v261
    %v272 = vunpack.c.h.bf16 %v261
    %v273 = vunpack.c.l.bf16 %v262
    %v274 = vunpack.c.h.bf16 %v262
    %v275 = vunpack.c.l.bf16 %v263
    %v276 = vunpack.c.h.bf16 %v263
    %v277 = vunpack.c.l.bf16 %v264
    %v278 = vunpack.c.h.bf16 %v264
    %v279 = vunpack.c.l.bf16 %v265
    %v280 = vunpack.c.h.bf16 %v265
    %v281 = vunpack.c.l.bf16 %v266
    %v282 = vunpack.c.h.bf16 %v266
    %v283 = vld [vmem:[#allocation6 + $0x1] sm:$0x1]
    %v284 = vlaneseq
    %v285 = vshrl.u32 %v284, 7
    %v286 = vsub.s32 0, %v285
    %v287 = vrot.slane %v283, %v286
    %288 = vmatprep.subr.mxu0 0.0
    %289 = vmatpush1.msra.mxu0 %v267
    %290 = vmatprep.subr.mxu0 0.0
    %291 = vmatpush1.msra.mxu0 %v268
    %292 = vmatprep.subr.mxu0 0.0
    %293 = vmatpush1.msra.mxu0 %v269
    %294 = vmatprep.subr.mxu0 0.0
    %295 = vmatpush1.msra.mxu0 %v270
    %296 = vmatprep.subr.mxu0 0.0
    %297 = vmatpush1.msra.mxu0 %v271
    %298 = vmatprep.subr.mxu0 0.0
    %299 = vmatpush1.msra.mxu0 %v272
    %300 = vmatprep.subr.mxu0 0.0
    %301 = vmatpush1.msra.mxu0 %v273
    %302 = vmatprep.subr.mxu0 0.0
    %303 = vmatpush1.msra.mxu0 %v274
    %304 = vmatprep.subr.mxu0 0.0
    %305 = vmatpush1.msra.mxu0 %v275
    %306 = vmatprep.subr.mxu0 0.0
    %307 = vmatpush1.msra.mxu0 %v276
    %308 = vmatprep.subr.mxu0 0.0
    %309 = vmatpush1.msra.mxu0 %v277
    %310 = vmatprep.subr.mxu0 0.0
    %311 = vmatpush1.msra.mxu0 %v278
    %312 = vmatprep.subr.mxu0 0.0
    %313 = vmatpush1.msra.mxu0 %v279
    %314 = vmatprep.subr.mxu0 0.0
    %315 = vmatpush1.msra.mxu0 %v280
    %316 = vmatprep.subr.mxu0 0.0
    %317 = vmatpush1.msra.mxu0 %v281
    %318 = vmatprep.subr.mxu0 0.0
    %319 = vmatpush1.msra.mxu0 %v282
    %320 = vmatprep.subr.mxu0 0.0
    %321 = vmatpush1.msra.mxu0 0.0
    %322 = vmatprep.subr.mxu0 0.0
    %323 = vmatpush1.msra.mxu0 0.0
    %324 = vmatprep.subr.mxu0 0.0
    %325 = vmatpush1.msra.mxu0 0.0
    %326 = vmatprep.subr.mxu0 0.0
    %327 = vmatpush1.msra.mxu0 0.0
    %328 = vmatprep.subr.mxu0 0.0
    %329 = vmatpush1.msra.mxu0 0.0
    %330 = vmatprep.subr.mxu0 0.0
    %331 = vmatpush1.msra.mxu0 0.0
    %332 = vmatprep.subr.mxu0 0.0
    %333 = vmatpush1.msra.mxu0 0.0
    %334 = vmatprep.subr.mxu0 0.0
    %335 = vmatpush1.msra.mxu0 0.0
    %336 = vmatprep.subr.mxu0 0.0
    %337 = vmatpush1.msra.mxu0 0.0
    %338 = vmatprep.subr.mxu0 0.0
    %339 = vmatpush1.msra.mxu0 0.0
    %340 = vmatprep.subr.mxu0 0.0
    %341 = vmatpush1.msra.mxu0 0.0
    %342 = vmatprep.subr.mxu0 0.0
    %343 = vmatpush1.msra.mxu0 0.0
    %344 = vmatprep.subr.mxu0 0.0
    %345 = vmatpush1.msra.mxu0 0.0
    %346 = vmatprep.subr.mxu0 0.0
    %347 = vmatpush1.msra.mxu0 0.0
    %348 = vmatprep.subr.mxu0 0.0
    %349 = vmatpush1.msra.mxu0 0.0
    %350 = vmatprep.subr.mxu0 0.0
    %351 = vmatpush1.msra.mxu0 0.0
    %352 = vmatprep.mubr.f32.mxu0 0.0
    %353 = vmatmul.mubr.f32.gmra.mrb[0].mxu0 %v256
    %v354 = vpop.f32.mrb[0].mxu0
    %v355 = vadd.f32 %v287, %v354
    %v356 = vpop.f32.mrb[0].mxu0
    %357 = vdwg.mxu0
    %v358 = vsub.f32 0.0, %v355
    %v359 = vmul.f32 %v358, 1.442695
    %v360 = vpow.pop %v359
    %v361 = vadd.f32 %v360, 1.0
    %v362 = vrcp.pop %v361
    %v363 = vmul.f32 1.0, %v362
    %s364 = sshll.u32 %s163, 4
    %365 = dma.done %s65, %s364
    %v366 = vld [vmem:[%s64] sm:$0xff]
    %v367 = vld [vmem:[%s64 + $0x8] sm:$0xff]
    %v368 = vld [vmem:[%s64 + $0x10] sm:$0xff]
    %v369 = vld [vmem:[%s64 + $0x18] sm:$0xff]
    %v370 = vld [vmem:[%s64 + $0x20] sm:$0xff]
    %v371 = vld [vmem:[%s64 + $0x28] sm:$0xff]
    %v372 = vld [vmem:[%s64 + $0x30] sm:$0xff]
    %v373 = vld [vmem:[%s64 + $0x38] sm:$0xff]
    %v374 = vunpack.c.l.bf16 %v366
    %v375 = vunpack.c.h.bf16 %v366
    %v376 = vunpack.c.l.bf16 %v367
    %v377 = vunpack.c.h.bf16 %v367
    %v378 = vunpack.c.l.bf16 %v368
    %v379 = vunpack.c.h.bf16 %v368
    %v380 = vunpack.c.l.bf16 %v369
    %v381 = vunpack.c.h.bf16 %v369
    %v382 = vunpack.c.l.bf16 %v370
    %v383 = vunpack.c.h.bf16 %v370
    %v384 = vunpack.c.l.bf16 %v371
    %v385 = vunpack.c.h.bf16 %v371
    %v386 = vunpack.c.l.bf16 %v372
    %v387 = vunpack.c.h.bf16 %v372
    %v388 = vunpack.c.l.bf16 %v373
    %v389 = vunpack.c.h.bf16 %v373
    %v390 = vld [vmem:[#allocation6 + $0x2] sm:$0x1]
    %v391 = vlaneseq
    %v392 = vshrl.u32 %v391, 7
    %v393 = vsub.s32 0, %v392
    %v394 = vrot.slane %v390, %v393
    %395 = vmatprep.subr.mxu0 0.0
    %396 = vmatpush1.msra.mxu0 %v374
    %397 = vmatprep.subr.mxu0 0.0
    %398 = vmatpush1.msra.mxu0 %v375
    %399 = vmatprep.subr.mxu0 0.0
    %400 = vmatpush1.msra.mxu0 %v376
    %401 = vmatprep.subr.mxu0 0.0
    %402 = vmatpush1.msra.mxu0 %v377
    %403 = vmatprep.subr.mxu0 0.0
    %404 = vmatpush1.msra.mxu0 %v378
    %405 = vmatprep.subr.mxu0 0.0
    %406 = vmatpush1.msra.mxu0 %v379
    %407 = vmatprep.subr.mxu0 0.0
    %408 = vmatpush1.msra.mxu0 %v380
    %409 = vmatprep.subr.mxu0 0.0
    %410 = vmatpush1.msra.mxu0 %v381
    %411 = vmatprep.subr.mxu0 0.0
    %412 = vmatpush1.msra.mxu0 %v382
    %413 = vmatprep.subr.mxu0 0.0
    %414 = vmatpush1.msra.mxu0 %v383
    %415 = vmatprep.subr.mxu0 0.0
    %416 = vmatpush1.msra.mxu0 %v384
    %417 = vmatprep.subr.mxu0 0.0
    %418 = vmatpush1.msra.mxu0 %v385
    %419 = vmatprep.subr.mxu0 0.0
    %420 = vmatpush1.msra.mxu0 %v386
    %421 = vmatprep.subr.mxu0 0.0
    %422 = vmatpush1.msra.mxu0 %v387
    %423 = vmatprep.subr.mxu0 0.0
    %424 = vmatpush1.msra.mxu0 %v388
    %425 = vmatprep.subr.mxu0 0.0
    %426 = vmatpush1.msra.mxu0 %v389
    %427 = vmatprep.subr.mxu0 0.0
    %428 = vmatpush1.msra.mxu0 0.0
    %429 = vmatprep.subr.mxu0 0.0
    %430 = vmatpush1.msra.mxu0 0.0
    %431 = vmatprep.subr.mxu0 0.0
    %432 = vmatpush1.msra.mxu0 0.0
    %433 = vmatprep.subr.mxu0 0.0
    %434 = vmatpush1.msra.mxu0 0.0
    %435 = vmatprep.subr.mxu0 0.0
    %436 = vmatpush1.msra.mxu0 0.0
    %437 = vmatprep.subr.mxu0 0.0
    %438 = vmatpush1.msra.mxu0 0.0
    %439 = vmatprep.subr.mxu0 0.0
    %440 = vmatpush1.msra.mxu0 0.0
    %441 = vmatprep.subr.mxu0 0.0
    %442 = vmatpush1.msra.mxu0 0.0
    %443 = vmatprep.subr.mxu0 0.0
    %444 = vmatpush1.msra.mxu0 0.0
    %445 = vmatprep.subr.mxu0 0.0
    %446 = vmatpush1.msra.mxu0 0.0
    %447 = vmatprep.subr.mxu0 0.0
    %448 = vmatpush1.msra.mxu0 0.0
    %449 = vmatprep.subr.mxu0 0.0
    %450 = vmatpush1.msra.mxu0 0.0
    %451 = vmatprep.subr.mxu0 0.0
    %452 = vmatpush1.msra.mxu0 0.0
    %453 = vmatprep.subr.mxu0 0.0
    %454 = vmatpush1.msra.mxu0 0.0
    %455 = vmatprep.subr.mxu0 0.0
    %456 = vmatpush1.msra.mxu0 0.0
    %457 = vmatprep.subr.mxu0 0.0
    %458 = vmatpush1.msra.mxu0 0.0
    %459 = vmatprep.mubr.f32.mxu0 0.0
    %460 = vmatmul.mubr.f32.gmra.mrb[0].mxu0 %v363
    %v461 = vpop.f32.mrb[0].mxu0
    %v462 = vadd.f32 %v394, %v461
    %v463 = vpop.f32.mrb[0].mxu0
    %464 = vdwg.mxu0
    %v465 = vsub.f32 0.0, %v462
    %v466 = vmul.f32 %v465, 1.442695
    %v467 = vpow.pop %v466
    %v468 = vadd.f32 %v467, 1.0
    %v469 = vrcp.pop %v468
    %v470 = vmul.f32 1.0, %v469
    %s471 = sshll.u32 %s163, 4
    %472 = dma.done %s79, %s471
    %v473 = vld [vmem:[%s78] sm:$0xff]
    %v474 = vld [vmem:[%s78 + $0x8] sm:$0xff]
    %v475 = vld [vmem:[%s78 + $0x10] sm:$0xff]
    %v476 = vld [vmem:[%s78 + $0x18] sm:$0xff]
    %v477 = vld [vmem:[%s78 + $0x20] sm:$0xff]
    %v478 = vld [vmem:[%s78 + $0x28] sm:$0xff]
    %v479 = vld [vmem:[%s78 + $0x30] sm:$0xff]
    %v480 = vld [vmem:[%s78 + $0x38] sm:$0xff]
    %v481 = vunpack.c.l.bf16 %v473
    %v482 = vunpack.c.h.bf16 %v473
    %v483 = vunpack.c.l.bf16 %v474
    %v484 = vunpack.c.h.bf16 %v474
    %v485 = vunpack.c.l.bf16 %v475
    %v486 = vunpack.c.h.bf16 %v475
    %v487 = vunpack.c.l.bf16 %v476
    %v488 = vunpack.c.h.bf16 %v476
    %v489 = vunpack.c.l.bf16 %v477
    %v490 = vunpack.c.h.bf16 %v477
    %v491 = vunpack.c.l.bf16 %v478
    %v492 = vunpack.c.h.bf16 %v478
    %v493 = vunpack.c.l.bf16 %v479
    %v494 = vunpack.c.h.bf16 %v479
    %v495 = vunpack.c.l.bf16 %v480
    %v496 = vunpack.c.h.bf16 %v480
    %v497 = vld [vmem:[#allocation6 + $0x3] sm:$0x1]
    %v498 = vlaneseq
    %v499 = vshrl.u32 %v498, 7
    %v500 = vsub.s32 0, %v499
    %v501 = vrot.slane %v497, %v500
    %502 = vmatprep.subr.mxu0 0.0
    %503 = vmatpush1.msra.mxu0 %v481
    %504 = vmatprep.subr.mxu0 0.0
    %505 = vmatpush1.msra.mxu0 %v482
    %506 = vmatprep.subr.mxu0 0.0
    %507 = vmatpush1.msra.mxu0 %v483
    %508 = vmatprep.subr.mxu0 0.0
    %509 = vmatpush1.msra.mxu0 %v484
    %510 = vmatprep.subr.mxu0 0.0
    %511 = vmatpush1.msra.mxu0 %v485
    %512 = vmatprep.subr.mxu0 0.0
    %513 = vmatpush1.msra.mxu0 %v486
    %514 = vmatprep.subr.mxu0 0.0
    %515 = vmatpush1.msra.mxu0 %v487
    %516 = vmatprep.subr.mxu0 0.0
    %517 = vmatpush1.msra.mxu0 %v488
    %518 = vmatprep.subr.mxu0 0.0
    %519 = vmatpush1.msra.mxu0 %v489
    %520 = vmatprep.subr.mxu0 0.0
    %521 = vmatpush1.msra.mxu0 %v490
    %522 = vmatprep.subr.mxu0 0.0
    %523 = vmatpush1.msra.mxu0 %v491
    %524 = vmatprep.subr.mxu0 0.0
    %525 = vmatpush1.msra.mxu0 %v492
    %526 = vmatprep.subr.mxu0 0.0
    %527 = vmatpush1.msra.mxu0 %v493
    %528 = vmatprep.subr.mxu0 0.0
    %529 = vmatpush1.msra.mxu0 %v494
    %530 = vmatprep.subr.mxu0 0.0
    %531 = vmatpush1.msra.mxu0 %v495
    %532 = vmatprep.subr.mxu0 0.0
    %533 = vmatpush1.msra.mxu0 %v496
    %534 = vmatprep.subr.mxu0 0.0
    %535 = vmatpush1.msra.mxu0 0.0
    %536 = vmatprep.subr.mxu0 0.0
    %537 = vmatpush1.msra.mxu0 0.0
    %538 = vmatprep.subr.mxu0 0.0
    %539 = vmatpush1.msra.mxu0 0.0
    %540 = vmatprep.subr.mxu0 0.0
    %541 = vmatpush1.msra.mxu0 0.0
    %542 = vmatprep.subr.mxu0 0.0
    %543 = vmatpush1.msra.mxu0 0.0
    %544 = vmatprep.subr.mxu0 0.0
    %545 = vmatpush1.msra.mxu0 0.0
    %546 = vmatprep.subr.mxu0 0.0
    %547 = vmatpush1.msra.mxu0 0.0
    %548 = vmatprep.subr.mxu0 0.0
    %549 = vmatpush1.msra.mxu0 0.0
    %550 = vmatprep.subr.mxu0 0.0
    %551 = vmatpush1.msra.mxu0 0.0
    %552 = vmatprep.subr.mxu0 0.0
    %553 = vmatpush1.msra.mxu0 0.0
    %554 = vmatprep.subr.mxu0 0.0
    %555 = vmatpush1.msra.mxu0 0.0
    %556 = vmatprep.subr.mxu0 0.0
    %557 = vmatpush1.msra.mxu0 0.0
    %558 = vmatprep.subr.mxu0 0.0
    %559 = vmatpush1.msra.mxu0 0.0
    %560 = vmatprep.subr.mxu0 0.0
    %561 = vmatpush1.msra.mxu0 0.0
    %562 = vmatprep.subr.mxu0 0.0
    %563 = vmatpush1.msra.mxu0 0.0
    %564 = vmatprep.subr.mxu0 0.0
    %565 = vmatpush1.msra.mxu0 0.0
    %566 = vmatprep.mubr.f32.mxu0 0.0
    %567 = vmatmul.mubr.f32.gmra.mrb[0].mxu0 %v470
    %v568 = vpop.f32.mrb[0].mxu0
    %v569 = vadd.f32 %v501, %v568
    %v570 = vpop.f32.mrb[0].mxu0
    %571 = vdwg.mxu0
    %v572 = vmax.f32 %v569, 0.0
    %v573 = vld [vmem:[#allocation6 + $0x4] sm:$0x1]
    %v574 = vlaneseq
    %v575 = vshrl.u32 %v574, 7
    %v576 = vsub.s32 0, %v575
    %v577 = vrot.slane %v573, %v576
    %v578 = vmul.f32 %v572, %v577
    %v579 = vld [vmem:[#allocation6 + $0x5] sm:$0x1]
    %v580 = vlaneseq
    %v581 = vshrl.u32 %v580, 7
    %v582 = vsub.s32 0, %v581
    %v583 = vrot.slane %v579, %v582
    %v584 = vadd.f32 %v578, %v583
    %s585 = sshll.u32 %s163, 4
    %586 = dma.done %s93, %s585
    %v587 = vld [vmem:[%s92] sm:$0xff]
    %v588 = vld [vmem:[%s92 + $0x8] sm:$0xff]
    %v589 = vld [vmem:[%s92 + $0x10] sm:$0xff]
    %v590 = vld [vmem:[%s92 + $0x18] sm:$0xff]
    %v591 = vld [vmem:[%s92 + $0x20] sm:$0xff]
    %v592 = vld [vmem:[%s92 + $0x28] sm:$0xff]
    %v593 = vld [vmem:[%s92 + $0x30] sm:$0xff]
    %v594 = vld [vmem:[%s92 + $0x38] sm:$0xff]
    %v595 = vunpack.c.l.bf16 %v587
    %v596 = vunpack.c.h.bf16 %v587
    %v597 = vunpack.c.l.bf16 %v588
    %v598 = vunpack.c.h.bf16 %v588
    %v599 = vunpack.c.l.bf16 %v589
    %v600 = vunpack.c.h.bf16 %v589
    %v601 = vunpack.c.l.bf16 %v590
    %v602 = vunpack.c.h.bf16 %v590
    %v603 = vunpack.c.l.bf16 %v591
    %v604 = vunpack.c.h.bf16 %v591
    %v605 = vunpack.c.l.bf16 %v592
    %v606 = vunpack.c.h.bf16 %v592
    %v607 = vunpack.c.l.bf16 %v593
    %v608 = vunpack.c.h.bf16 %v593
    %v609 = vunpack.c.l.bf16 %v594
    %v610 = vunpack.c.h.bf16 %v594
    %v611 = vld [vmem:[#allocation6 + $0x6] sm:$0x1]
    %v612 = vlaneseq
    %v613 = vshrl.u32 %v612, 7
    %v614 = vsub.s32 0, %v613
    %v615 = vrot.slane %v611, %v614
    %616 = vmatprep.subr.mxu0 0.0
    %617 = vmatpush1.msra.mxu0 %v595
    %618 = vmatprep.subr.mxu0 0.0
    %619 = vmatpush1.msra.mxu0 %v596
    %620 = vmatprep.subr.mxu0 0.0
    %621 = vmatpush1.msra.mxu0 %v597
    %622 = vmatprep.subr.mxu0 0.0
    %623 = vmatpush1.msra.mxu0 %v598
    %624 = vmatprep.subr.mxu0 0.0
    %625 = vmatpush1.msra.mxu0 %v599
    %626 = vmatprep.subr.mxu0 0.0
    %627 = vmatpush1.msra.mxu0 %v600
    %628 = vmatprep.subr.mxu0 0.0
    %629 = vmatpush1.msra.mxu0 %v601
    %630 = vmatprep.subr.mxu0 0.0
    %631 = vmatpush1.msra.mxu0 %v602
    %632 = vmatprep.subr.mxu0 0.0
    %633 = vmatpush1.msra.mxu0 %v603
    %634 = vmatprep.subr.mxu0 0.0
    %635 = vmatpush1.msra.mxu0 %v604
    %636 = vmatprep.subr.mxu0 0.0
    %637 = vmatpush1.msra.mxu0 %v605
    %638 = vmatprep.subr.mxu0 0.0
    %639 = vmatpush1.msra.mxu0 %v606
    %640 = vmatprep.subr.mxu0 0.0
    %641 = vmatpush1.msra.mxu0 %v607
    %642 = vmatprep.subr.mxu0 0.0
    %643 = vmatpush1.msra.mxu0 %v608
    %644 = vmatprep.subr.mxu0 0.0
    %645 = vmatpush1.msra.mxu0 %v609
    %646 = vmatprep.subr.mxu0 0.0
    %647 = vmatpush1.msra.mxu0 %v610
    %648 = vmatprep.subr.mxu0 0.0
    %649 = vmatpush1.msra.mxu0 0.0
    %650 = vmatprep.subr.mxu0 0.0
    %651 = vmatpush1.msra.mxu0 0.0
    %652 = vmatprep.subr.mxu0 0.0
    %653 = vmatpush1.msra.mxu0 0.0
    %654 = vmatprep.subr.mxu0 0.0
    %655 = vmatpush1.msra.mxu0 0.0
    %656 = vmatprep.subr.mxu0 0.0
    %657 = vmatpush1.msra.mxu0 0.0
    %658 = vmatprep.subr.mxu0 0.0
    %659 = vmatpush1.msra.mxu0 0.0
    %660 = vmatprep.subr.mxu0 0.0
    %661 = vmatpush1.msra.mxu0 0.0
    %662 = vmatprep.subr.mxu0 0.0
    %663 = vmatpush1.msra.mxu0 0.0
    %664 = vmatprep.subr.mxu0 0.0
    %665 = vmatpush1.msra.mxu0 0.0
    %666 = vmatprep.subr.mxu0 0.0
    %667 = vmatpush1.msra.mxu0 0.0
    %668 = vmatprep.subr.mxu0 0.0
    %669 = vmatpush1.msra.mxu0 0.0
    %670 = vmatprep.subr.mxu0 0.0
    %671 = vmatpush1.msra.mxu0 0.0
    %672 = vmatprep.subr.mxu0 0.0
    %673 = vmatpush1.msra.mxu0 0.0
    %674 = vmatprep.subr.mxu0 0.0
    %675 = vmatpush1.msra.mxu0 0.0
    %676 = vmatprep.subr.mxu0 0.0
    %677 = vmatpush1.msra.mxu0 0.0
    %678 = vmatprep.subr.mxu0 0.0
    %679 = vmatpush1.msra.mxu0 0.0
    %680 = vmatprep.mubr.f32.mxu0 0.0
    %681 = vmatmul.mubr.f32.gmra.mrb[0].mxu0 %v584
    %v682 = vpop.f32.mrb[0].mxu0
    %v683 = vadd.f32 %v615, %v682
    %v684 = vpop.f32.mrb[0].mxu0
    %685 = vdwg.mxu0
    %v686 = vmax.f32 %v683, 0.0
    %v687 = vld [vmem:[#allocation6 + $0x7] sm:$0x1]
    %v688 = vlaneseq
    %v689 = vshrl.u32 %v688, 7
    %v690 = vsub.s32 0, %v689
    %v691 = vrot.slane %v687, %v690
    %v692 = vmul.f32 %v686, %v691
    %v693 = vld [vmem:[#allocation6 + $0x8] sm:$0x1]
    %v694 = vlaneseq
    %v695 = vshrl.u32 %v694, 7
    %v696 = vsub.s32 0, %v695
    %v697 = vrot.slane %v693, %v696
    %v698 = vadd.f32 %v692, %v697
    %s699 = sshll.u32 %s163, 4
    %700 = dma.done %s107, %s699
    %v701 = vld [vmem:[%s106] sm:$0xff]
    %v702 = vld [vmem:[%s106 + $0x8] sm:$0xff]
    %v703 = vld [vmem:[%s106 + $0x10] sm:$0xff]
    %v704 = vld [vmem:[%s106 + $0x18] sm:$0xff]
    %v705 = vld [vmem:[%s106 + $0x20] sm:$0xff]
    %v706 = vld [vmem:[%s106 + $0x28] sm:$0xff]
    %v707 = vld [vmem:[%s106 + $0x30] sm:$0xff]
    %v708 = vld [vmem:[%s106 + $0x38] sm:$0xff]
    %v709 = vunpack.c.l.bf16 %v701
    %v710 = vunpack.c.h.bf16 %v701
    %v711 = vunpack.c.l.bf16 %v702
    %v712 = vunpack.c.h.bf16 %v702
    %v713 = vunpack.c.l.bf16 %v703
    %v714 = vunpack.c.h.bf16 %v703
    %v715 = vunpack.c.l.bf16 %v704
    %v716 = vunpack.c.h.bf16 %v704
    %v717 = vunpack.c.l.bf16 %v705
    %v718 = vunpack.c.h.bf16 %v705
    %v719 = vunpack.c.l.bf16 %v706
    %v720 = vunpack.c.h.bf16 %v706
    %v721 = vunpack.c.l.bf16 %v707
    %v722 = vunpack.c.h.bf16 %v707
    %v723 = vunpack.c.l.bf16 %v708
    %v724 = vunpack.c.h.bf16 %v708
    %v725 = vld [vmem:[#allocation6 + $0x9] sm:$0x1]
    %v726 = vlaneseq
    %v727 = vshrl.u32 %v726, 7
    %v728 = vsub.s32 0, %v727
    %v729 = vrot.slane %v725, %v728
    %730 = vmatprep.subr.mxu0 0.0
    %731 = vmatpush1.msra.mxu0 %v709
    %732 = vmatprep.subr.mxu0 0.0
    %733 = vmatpush1.msra.mxu0 %v710
    %734 = vmatprep.subr.mxu0 0.0
    %735 = vmatpush1.msra.mxu0 %v711
    %736 = vmatprep.subr.mxu0 0.0
    %737 = vmatpush1.msra.mxu0 %v712
    %738 = vmatprep.subr.mxu0 0.0
    %739 = vmatpush1.msra.mxu0 %v713
    %740 = vmatprep.subr.mxu0 0.0
    %741 = vmatpush1.msra.mxu0 %v714
    %742 = vmatprep.subr.mxu0 0.0
    %743 = vmatpush1.msra.mxu0 %v715
    %744 = vmatprep.subr.mxu0 0.0
    %745 = vmatpush1.msra.mxu0 %v716
    %746 = vmatprep.subr.mxu0 0.0
    %747 = vmatpush1.msra.mxu0 %v717
    %748 = vmatprep.subr.mxu0 0.0
    %749 = vmatpush1.msra.mxu0 %v718
    %750 = vmatprep.subr.mxu0 0.0
    %751 = vmatpush1.msra.mxu0 %v719
    %752 = vmatprep.subr.mxu0 0.0
    %753 = vmatpush1.msra.mxu0 %v720
    %754 = vmatprep.subr.mxu0 0.0
    %755 = vmatpush1.msra.mxu0 %v721
    %756 = vmatprep.subr.mxu0 0.0
    %757 = vmatpush1.msra.mxu0 %v722
    %758 = vmatprep.subr.mxu0 0.0
    %759 = vmatpush1.msra.mxu0 %v723
    %760 = vmatprep.subr.mxu0 0.0
    %761 = vmatpush1.msra.mxu0 %v724
    %762 = vmatprep.subr.mxu0 0.0
    %763 = vmatpush1.msra.mxu0 0.0
    %764 = vmatprep.subr.mxu0 0.0
    %765 = vmatpush1.msra.mxu0 0.0
    %766 = vmatprep.subr.mxu0 0.0
    %767 = vmatpush1.msra.mxu0 0.0
    %768 = vmatprep.subr.mxu0 0.0
    %769 = vmatpush1.msra.mxu0 0.0
    %770 = vmatprep.subr.mxu0 0.0
    %771 = vmatpush1.msra.mxu0 0.0
    %772 = vmatprep.subr.mxu0 0.0
    %773 = vmatpush1.msra.mxu0 0.0
    %774 = vmatprep.subr.mxu0 0.0
    %775 = vmatpush1.msra.mxu0 0.0
    %776 = vmatprep.subr.mxu0 0.0
    %777 = vmatpush1.msra.mxu0 0.0
    %778 = vmatprep.subr.mxu0 0.0
    %779 = vmatpush1.msra.mxu0 0.0
    %780 = vmatprep.subr.mxu0 0.0
    %781 = vmatpush1.msra.mxu0 0.0
    %782 = vmatprep.subr.mxu0 0.0
    %783 = vmatpush1.msra.mxu0 0.0
    %784 = vmatprep.subr.mxu0 0.0
    %785 = vmatpush1.msra.mxu0 0.0
    %786 = vmatprep.subr.mxu0 0.0
    %787 = vmatpush1.msra.mxu0 0.0
    %788 = vmatprep.subr.mxu0 0.0
    %789 = vmatpush1.msra.mxu0 0.0
    %790 = vmatprep.subr.mxu0 0.0
    %791 = vmatpush1.msra.mxu0 0.0
    %792 = vmatprep.subr.mxu0 0.0
    %793 = vmatpush1.msra.mxu0 0.0
    %794 = vmatprep.mubr.f32.mxu0 0.0
    %795 = vmatmul.mubr.f32.gmra.mrb[0].mxu0 %v698
    %v796 = vpop.f32.mrb[0].mxu0
    %v797 = vadd.f32 %v729, %v796
    %v798 = vpop.f32.mrb[0].mxu0
    %799 = vdwg.mxu0
    %v800 = vsub.f32 0.0, %v797
    %v801 = vmul.f32 %v800, 1.442695
    %v802 = vpow.pop %v801
    %v803 = vadd.f32 %v802, 1.0
    %v804 = vrcp.pop %v803
    %v805 = vmul.f32 1.0, %v804
    %v806 = vlaneseq
    %v807 = vand.u32 %v806, 127
    %vm808 = vcmp.lt.s32.totalorder %v807, 64
    %810 = vset.pattern.permute.xlu0 32
    %811 = vperm.xlu0 %810, %v805
    %v812 = vpop.permute.xlu0 %811
    %v814 = vsel %vm808, 1.0, %v812
    %s815 = sshll.u32 %s163, 4
    %816 = dma.done %s121, %s815
    %v817 = vld [vmem:[%s120] sm:$0xff]
    %v818 = vld [vmem:[%s120 + $0x8] sm:$0xff]
    %v819 = vld [vmem:[%s120 + $0x10] sm:$0xff]
    %v820 = vld [vmem:[%s120 + $0x18] sm:$0xff]
    %v821 = vld [vmem:[%s120 + $0x20] sm:$0xff]
    %v822 = vld [vmem:[%s120 + $0x28] sm:$0xff]
    %v823 = vld [vmem:[%s120 + $0x30] sm:$0xff]
    %v824 = vld [vmem:[%s120 + $0x38] sm:$0xff]
    %v825 = vunpack.c.l.bf16 %v817
    %v826 = vunpack.c.h.bf16 %v817
    %v827 = vunpack.c.l.bf16 %v818
    %v828 = vunpack.c.h.bf16 %v818
    %v829 = vunpack.c.l.bf16 %v819
    %v830 = vunpack.c.h.bf16 %v819
    %v831 = vunpack.c.l.bf16 %v820
    %v832 = vunpack.c.h.bf16 %v820
    %v833 = vunpack.c.l.bf16 %v821
    %v834 = vunpack.c.h.bf16 %v821
    %v835 = vunpack.c.l.bf16 %v822
    %v836 = vunpack.c.h.bf16 %v822
    %v837 = vunpack.c.l.bf16 %v823
    %v838 = vunpack.c.h.bf16 %v823
    %v839 = vunpack.c.l.bf16 %v824
    %v840 = vunpack.c.h.bf16 %v824
    %841 = vmatprep.subr.mxu0 0.0
    %842 = vmatpush1.msra.mxu0 %v825
    %843 = vmatprep.subr.mxu0 0.0
    %844 = vmatpush1.msra.mxu0 %v826
    %845 = vmatprep.subr.mxu0 0.0
    %846 = vmatpush1.msra.mxu0 %v827
    %847 = vmatprep.subr.mxu0 0.0
    %848 = vmatpush1.msra.mxu0 %v828
    %849 = vmatprep.subr.mxu0 0.0
    %850 = vmatpush1.msra.mxu0 %v829
    %851 = vmatprep.subr.mxu0 0.0
    %852 = vmatpush1.msra.mxu0 %v830
    %853 = vmatprep.subr.mxu0 0.0
    %854 = vmatpush1.msra.mxu0 %v831
    %855 = vmatprep.subr.mxu0 0.0
    %856 = vmatpush1.msra.mxu0 %v832
    %857 = vmatprep.subr.mxu0 0.0
    %858 = vmatpush1.msra.mxu0 %v833
    %859 = vmatprep.subr.mxu0 0.0
    %860 = vmatpush1.msra.mxu0 %v834
    %861 = vmatprep.subr.mxu0 0.0
    %862 = vmatpush1.msra.mxu0 %v835
    %863 = vmatprep.subr.mxu0 0.0
    %864 = vmatpush1.msra.mxu0 %v836
    %865 = vmatprep.subr.mxu0 0.0
    %866 = vmatpush1.msra.mxu0 %v837
    %867 = vmatprep.subr.mxu0 0.0
    %868 = vmatpush1.msra.mxu0 %v838
    %869 = vmatprep.subr.mxu0 0.0
    %870 = vmatpush1.msra.mxu0 %v839
    %871 = vmatprep.subr.mxu0 0.0
    %872 = vmatpush1.msra.mxu0 %v840
    %873 = vmatprep.subr.mxu0 0.0
    %874 = vmatpush1.msra.mxu0 0.0
    %875 = vmatprep.subr.mxu0 0.0
    %876 = vmatpush1.msra.mxu0 0.0
    %877 = vmatprep.subr.mxu0 0.0
    %878 = vmatpush1.msra.mxu0 0.0
    %879 = vmatprep.subr.mxu0 0.0
    %880 = vmatpush1.msra.mxu0 0.0
    %881 = vmatprep.subr.mxu0 0.0
    %882 = vmatpush1.msra.mxu0 0.0
    %883 = vmatprep.subr.mxu0 0.0
    %884 = vmatpush1.msra.mxu0 0.0
    %885 = vmatprep.subr.mxu0 0.0
    %886 = vmatpush1.msra.mxu0 0.0
    %887 = vmatprep.subr.mxu0 0.0
    %888 = vmatpush1.msra.mxu0 0.0
    %889 = vmatprep.subr.mxu0 0.0
    %890 = vmatpush1.msra.mxu0 0.0
    %891 = vmatprep.subr.mxu0 0.0
    %892 = vmatpush1.msra.mxu0 0.0
    %893 = vmatprep.subr.mxu0 0.0
    %894 = vmatpush1.msra.mxu0 0.0
    %895 = vmatprep.subr.mxu0 0.0
    %896 = vmatpush1.msra.mxu0 0.0
    %897 = vmatprep.subr.mxu0 0.0
    %898 = vmatpush1.msra.mxu0 0.0
    %899 = vmatprep.subr.mxu0 0.0
    %900 = vmatpush1.msra.mxu0 0.0
    %901 = vmatprep.subr.mxu0 0.0
    %902 = vmatpush1.msra.mxu0 0.0
    %903 = vmatprep.subr.mxu0 0.0
    %904 = vmatpush1.msra.mxu0 0.0
    %905 = vmatprep.mubr.f32.mxu0 0.0
    %906 = vmatmul.mubr.f32.gmra.mrb[0].mxu0 %v470
    %v907 = vpop.f32.mrb[0].mxu0
    %v908 = vadd.f32 0.0, %v907
    %v909 = vpop.f32.mrb[0].mxu0
    %910 = vdwg.mxu0
    %v911 = vmul.f32 %v908, %v814
    %v912 = vld [vmem:[#allocation6 + $0xa] sm:$0x1]
    %v913 = vlaneseq
    %v914 = vshrl.u32 %v913, 7
    %v915 = vsub.s32 0, %v914
    %v916 = vrot.slane %v912, %v915
    %v917 = vadd.f32 %v911, %v916
    %v918 = vsub.f32 0.0, %v917
    %v919 = vmul.f32 %v918, 1.442695
    %v920 = vpow.pop %v919
    %v921 = vadd.f32 %v920, 1.0
    %v922 = vrcp.pop %v921
    %v923 = vmul.f32 1.0, %v922
    %v924 = vmax.f32 %v917, 0.0
    %v925 = vld [vmem:[#allocation6 + $0xb] sm:$0x1]
    %v926 = vlaneseq
    %v927 = vshrl.u32 %v926, 7
    %v928 = vsub.s32 0, %v927
    %v929 = vrot.slane %v925, %v928
    %v930 = vmul.f32 %v924, %v929
    %v931 = vld [vmem:[#allocation6 + $0xc] sm:$0x1]
    %v932 = vlaneseq
    %v933 = vshrl.u32 %v932, 7
    %v934 = vsub.s32 0, %v933
    %v935 = vrot.slane %v931, %v934
    %v936 = vadd.f32 %v930, %v935
    %v937 = vsel %vm808, %v923, %v936
    %s938 = sshll.u32 %s163, 4
    %939 = dma.done %s135, %s938
    %v940 = vld [vmem:[%s134] sm:$0xff]
    %v941 = vld [vmem:[%s134 + $0x8] sm:$0xff]
    %v942 = vld [vmem:[%s134 + $0x10] sm:$0xff]
    %v943 = vld [vmem:[%s134 + $0x18] sm:$0xff]
    %v944 = vld [vmem:[%s134 + $0x20] sm:$0xff]
    %v945 = vld [vmem:[%s134 + $0x28] sm:$0xff]
    %v946 = vld [vmem:[%s134 + $0x30] sm:$0xff]
    %v947 = vld [vmem:[%s134 + $0x38] sm:$0xff]
    %v948 = vunpack.c.l.bf16 %v940
    %v949 = vunpack.c.h.bf16 %v940
    %v950 = vunpack.c.l.bf16 %v941
    %v951 = vunpack.c.h.bf16 %v941
    %v952 = vunpack.c.l.bf16 %v942
    %v953 = vunpack.c.h.bf16 %v942
    %v954 = vunpack.c.l.bf16 %v943
    %v955 = vunpack.c.h.bf16 %v943
    %v956 = vunpack.c.l.bf16 %v944
    %v957 = vunpack.c.h.bf16 %v944
    %v958 = vunpack.c.l.bf16 %v945
    %v959 = vunpack.c.h.bf16 %v945
    %v960 = vunpack.c.l.bf16 %v946
    %v961 = vunpack.c.h.bf16 %v946
    %v962 = vunpack.c.l.bf16 %v947
    %v963 = vunpack.c.h.bf16 %v947
    %v964 = vld [vmem:[#allocation6 + $0xd] sm:$0x1]
    %v965 = vlaneseq
    %v966 = vshrl.u32 %v965, 7
    %v967 = vsub.s32 0, %v966
    %v968 = vrot.slane %v964, %v967
    %969 = vmatprep.subr.mxu0 0.0
    %970 = vmatpush1.msra.mxu0 %v948
    %971 = vmatprep.subr.mxu0 0.0
    %972 = vmatpush1.msra.mxu0 %v949
    %973 = vmatprep.subr.mxu0 0.0
    %974 = vmatpush1.msra.mxu0 %v950
    %975 = vmatprep.subr.mxu0 0.0
    %976 = vmatpush1.msra.mxu0 %v951
    %977 = vmatprep.subr.mxu0 0.0
    %978 = vmatpush1.msra.mxu0 %v952
    %979 = vmatprep.subr.mxu0 0.0
    %980 = vmatpush1.msra.mxu0 %v953
    %981 = vmatprep.subr.mxu0 0.0
    %982 = vmatpush1.msra.mxu0 %v954
    %983 = vmatprep.subr.mxu0 0.0
    %984 = vmatpush1.msra.mxu0 %v955
    %985 = vmatprep.subr.mxu0 0.0
    %986 = vmatpush1.msra.mxu0 %v956
    %987 = vmatprep.subr.mxu0 0.0
    %988 = vmatpush1.msra.mxu0 %v957
    %989 = vmatprep.subr.mxu0 0.0
    %990 = vmatpush1.msra.mxu0 %v958
    %991 = vmatprep.subr.mxu0 0.0
    %992 = vmatpush1.msra.mxu0 %v959
    %993 = vmatprep.subr.mxu0 0.0
    %994 = vmatpush1.msra.mxu0 %v960
    %995 = vmatprep.subr.mxu0 0.0
    %996 = vmatpush1.msra.mxu0 %v961
    %997 = vmatprep.subr.mxu0 0.0
    %998 = vmatpush1.msra.mxu0 %v962
    %999 = vmatprep.subr.mxu0 0.0
    %1000 = vmatpush1.msra.mxu0 %v963
    %1001 = vmatprep.subr.mxu0 0.0
    %1002 = vmatpush1.msra.mxu0 0.0
    %1003 = vmatprep.subr.mxu0 0.0
    %1004 = vmatpush1.msra.mxu0 0.0
    %1005 = vmatprep.subr.mxu0 0.0
    %1006 = vmatpush1.msra.mxu0 0.0
    %1007 = vmatprep.subr.mxu0 0.0
    %1008 = vmatpush1.msra.mxu0 0.0
    %1009 = vmatprep.subr.mxu0 0.0
    %1010 = vmatpush1.msra.mxu0 0.0
    %1011 = vmatprep.subr.mxu0 0.0
    %1012 = vmatpush1.msra.mxu0 0.0
    %1013 = vmatprep.subr.mxu0 0.0
    %1014 = vmatpush1.msra.mxu0 0.0
    %1015 = vmatprep.subr.mxu0 0.0
    %1016 = vmatpush1.msra.mxu0 0.0
    %1017 = vmatprep.subr.mxu0 0.0
    %1018 = vmatpush1.msra.mxu0 0.0
    %1019 = vmatprep.subr.mxu0 0.0
    %1020 = vmatpush1.msra.mxu0 0.0
    %1021 = vmatprep.subr.mxu0 0.0
    %1022 = vmatpush1.msra.mxu0 0.0
    %1023 = vmatprep.subr.mxu0 0.0
    %1024 = vmatpush1.msra.mxu0 0.0
    %1025 = vmatprep.subr.mxu0 0.0
    %1026 = vmatpush1.msra.mxu0 0.0
    %1027 = vmatprep.subr.mxu0 0.0
    %1028 = vmatpush1.msra.mxu0 0.0
    %1029 = vmatprep.subr.mxu0 0.0
    %1030 = vmatpush1.msra.mxu0 0.0
    %1031 = vmatprep.subr.mxu0 0.0
    %1032 = vmatpush1.msra.mxu0 0.0
    %1033 = vmatprep.mubr.f32.mxu0 0.0
    %1034 = vmatmul.mubr.f32.gmra.mrb[0].mxu0 %v937
    %v1035 = vpop.f32.mrb[0].mxu0
    %v1036 = vadd.f32 %v968, %v1035
    %v1037 = vpop.f32.mrb[0].mxu0
    %1038 = vdwg.mxu0
    %v1039 = vsub.f32 0.0, %v1036
    %v1040 = vmul.f32 %v1039, 1.442695
    %v1041 = vpow.pop %v1040
    %v1042 = vadd.f32 %v1041, 1.0
    %v1043 = vrcp.pop %v1042
    %v1044 = vmul.f32 1.0, %v1043
    %v1045 = vmax.f32 %v1036, 0.0
    %v1046 = vld [vmem:[#allocation6 + $0xe] sm:$0x1]
    %v1047 = vlaneseq
    %v1048 = vshrl.u32 %v1047, 7
    %v1049 = vsub.s32 0, %v1048
    %v1050 = vrot.slane %v1046, %v1049
    %v1051 = vmul.f32 %v1045, %v1050
    %v1052 = vld [vmem:[#allocation6 + $0xf] sm:$0x1]
    %v1053 = vlaneseq
    %v1054 = vshrl.u32 %v1053, 7
    %v1055 = vsub.s32 0, %v1054
    %v1056 = vrot.slane %v1052, %v1055
    %v1057 = vadd.f32 %v1051, %v1056
    %v1058 = vsel %vm808, %v1044, %v1057
    %s1059 = sshll.u32 %s163, 4
    %1060 = dma.done %s149, %s1059
    %v1061 = vld [vmem:[%s148] sm:$0xff]
    %v1062 = vld [vmem:[%s148 + $0x8] sm:$0xff]
    %v1063 = vld [vmem:[%s148 + $0x10] sm:$0xff]
    %v1064 = vld [vmem:[%s148 + $0x18] sm:$0xff]
    %v1065 = vld [vmem:[%s148 + $0x20] sm:$0xff]
    %v1066 = vld [vmem:[%s148 + $0x28] sm:$0xff]
    %v1067 = vld [vmem:[%s148 + $0x30] sm:$0xff]
    %v1068 = vld [vmem:[%s148 + $0x38] sm:$0xff]
    %v1069 = vunpack.c.l.bf16 %v1061
    %v1070 = vunpack.c.h.bf16 %v1061
    %v1071 = vunpack.c.l.bf16 %v1062
    %v1072 = vunpack.c.h.bf16 %v1062
    %v1073 = vunpack.c.l.bf16 %v1063
    %v1074 = vunpack.c.h.bf16 %v1063
    %v1075 = vunpack.c.l.bf16 %v1064
    %v1076 = vunpack.c.h.bf16 %v1064
    %v1077 = vunpack.c.l.bf16 %v1065
    %v1078 = vunpack.c.h.bf16 %v1065
    %v1079 = vunpack.c.l.bf16 %v1066
    %v1080 = vunpack.c.h.bf16 %v1066
    %v1081 = vunpack.c.l.bf16 %v1067
    %v1082 = vunpack.c.h.bf16 %v1067
    %v1083 = vunpack.c.l.bf16 %v1068
    %v1084 = vunpack.c.h.bf16 %v1068
    %v1085 = vld [vmem:[#allocation6 + $0x10] sm:$0x1]
    %v1086 = vlaneseq
    %v1087 = vshrl.u32 %v1086, 7
    %v1088 = vsub.s32 0, %v1087
    %v1089 = vrot.slane %v1085, %v1088
    %1090 = vmatprep.subr.mxu0 0.0
    %1091 = vmatpush1.msra.mxu0 %v1069
    %1092 = vmatprep.subr.mxu0 0.0
    %1093 = vmatpush1.msra.mxu0 %v1070
    %1094 = vmatprep.subr.mxu0 0.0
    %1095 = vmatpush1.msra.mxu0 %v1071
    %1096 = vmatprep.subr.mxu0 0.0
    %1097 = vmatpush1.msra.mxu0 %v1072
    %1098 = vmatprep.subr.mxu0 0.0
    %1099 = vmatpush1.msra.mxu0 %v1073
    %1100 = vmatprep.subr.mxu0 0.0
    %1101 = vmatpush1.msra.mxu0 %v1074
    %1102 = vmatprep.subr.mxu0 0.0
    %1103 = vmatpush1.msra.mxu0 %v1075
    %1104 = vmatprep.subr.mxu0 0.0
    %1105 = vmatpush1.msra.mxu0 %v1076
    %1106 = vmatprep.subr.mxu0 0.0
    %1107 = vmatpush1.msra.mxu0 %v1077
    %1108 = vmatprep.subr.mxu0 0.0
    %1109 = vmatpush1.msra.mxu0 %v1078
    %1110 = vmatprep.subr.mxu0 0.0
    %1111 = vmatpush1.msra.mxu0 %v1079
    %1112 = vmatprep.subr.mxu0 0.0
    %1113 = vmatpush1.msra.mxu0 %v1080
    %1114 = vmatprep.subr.mxu0 0.0
    %1115 = vmatpush1.msra.mxu0 %v1081
    %1116 = vmatprep.subr.mxu0 0.0
    %1117 = vmatpush1.msra.mxu0 %v1082
    %1118 = vmatprep.subr.mxu0 0.0
    %1119 = vmatpush1.msra.mxu0 %v1083
    %1120 = vmatprep.subr.mxu0 0.0
    %1121 = vmatpush1.msra.mxu0 %v1084
    %1122 = vmatprep.subr.mxu0 0.0
    %1123 = vmatpush1.msra.mxu0 0.0
    %1124 = vmatprep.subr.mxu0 0.0
    %1125 = vmatpush1.msra.mxu0 0.0
    %1126 = vmatprep.subr.mxu0 0.0
    %1127 = vmatpush1.msra.mxu0 0.0
    %1128 = vmatprep.subr.mxu0 0.0
    %1129 = vmatpush1.msra.mxu0 0.0
    %1130 = vmatprep.subr.mxu0 0.0
    %1131 = vmatpush1.msra.mxu0 0.0
    %1132 = vmatprep.subr.mxu0 0.0
    %1133 = vmatpush1.msra.mxu0 0.0
    %1134 = vmatprep.subr.mxu0 0.0
    %1135 = vmatpush1.msra.mxu0 0.0
    %1136 = vmatprep.subr.mxu0 0.0
    %1137 = vmatpush1.msra.mxu0 0.0
    %1138 = vmatprep.subr.mxu0 0.0
    %1139 = vmatpush1.msra.mxu0 0.0
    %1140 = vmatprep.subr.mxu0 0.0
    %1141 = vmatpush1.msra.mxu0 0.0
    %1142 = vmatprep.subr.mxu0 0.0
    %1143 = vmatpush1.msra.mxu0 0.0
    %1144 = vmatprep.subr.mxu0 0.0
    %1145 = vmatpush1.msra.mxu0 0.0
    %1146 = vmatprep.subr.mxu0 0.0
    %1147 = vmatpush1.msra.mxu0 0.0
    %1148 = vmatprep.subr.mxu0 0.0
    %1149 = vmatpush1.msra.mxu0 0.0
    %1150 = vmatprep.subr.mxu0 0.0
    %1151 = vmatpush1.msra.mxu0 0.0
    %1152 = vmatprep.subr.mxu0 0.0
    %1153 = vmatpush1.msra.mxu0 0.0
    %1154 = vmatprep.mubr.f32.mxu0 0.0
    %1155 = vmatmul.mubr.f32.gmra.mrb[0].mxu0 %v1058
    %v1156 = vpop.f32.mrb[0].mxu0
    %v1157 = vadd.f32 %v1089, %v1156
    %v1158 = vpop.f32.mrb[0].mxu0
    %1159 = vdwg.mxu0
    %v1160 = vsub.f32 0.0, %v1157
    %v1161 = vmul.f32 %v1160, 1.442695
    %v1162 = vpow.pop %v1161
    %v1163 = vadd.f32 %v1162, 1.0
    %v1164 = vrcp.pop %v1163
    %v1165 = vmul.f32 1.0, %v1164
    %vm1166 = vcmp.eq.s32.totalorder %v807, 32
    %vm1167 = vcmp.eq.s32.totalorder %v807, 33
    %vm1168 = vmor %vm1166, %vm1167
    %v1169 = vsel %vm1168, %v805, %v1165
    %1170 = vst [vmem:[%s3] sm:$0xff] %v1169
    // Predicated region
    $region54: #{complete_model_forward.1} parent=1 // pred_check
      _
    $region55: #{complete_model_forward.1} parent=1 // pred_check_branch
      %1172 = sbr.rel (0) target = $region57
    $region56: #{complete_model_forward.1} parent=1 // pred_region
      _
    $region57: #{complete_model_forward.1} parent=1 // pred_fallthru
      _
    // Predicated region
    $region58: #{complete_model_forward.1} parent=1 // pred_check
      _
    $region59: #{complete_model_forward.1} parent=1 // pred_check_branch
      %1174 = sbr.rel (0) target = $region61
    $region60: #{complete_model_forward.1} parent=1 // pred_region
      _
    $region61: #{complete_model_forward.1} parent=1 // pred_fallthru
      _
    %1175 = vsyncpa [#allocation5], 1
    %1176 = vsyncpa [#allocation7], 1
  %1177 = vsyncmov [#allocation3]
  %s1178 = vpop.sfrf %1177
  %p1179 = scmp.eq.s32.totalorder %s1178, 0
  %p1180 = pneg %p1179
  %1182 = shalt.err (%p1180)
  %s1183 = scalar_lea.sflag [#allocation3], 1
  %1184 = vsyncmov %s1183
  %s1185 = vpop.sfrf %1184
  %p1186 = scmp.eq.s32.totalorder %s1185, 0
  %p1187 = pneg %p1186
  %1189 = shalt.err (%p1187)
  %s1190 = scalar_lea.sflag [#allocation3], 2
  %1191 = vsyncmov %s1190
  %s1192 = vpop.sfrf %1191
  %p1193 = scmp.eq.s32.totalorder %s1192, 0
  %p1194 = pneg %p1193
  %1196 = shalt.err (%p1194)
  %s1197 = scalar_lea.sflag [#allocation3], 3
  %1198 = vsyncmov %s1197
  %s1199 = vpop.sfrf %1198
  %p1200 = scmp.eq.s32.totalorder %s1199, 0
  %p1201 = pneg %p1200
  %1203 = shalt.err (%p1201)
  %s1204 = scalar_lea.sflag [#allocation3], 4
  %1205 = vsyncmov %s1204
  %s1206 = vpop.sfrf %1205
  %p1207 = scmp.eq.s32.totalorder %s1206, 0
  %p1208 = pneg %p1207
  %1210 = shalt.err (%p1208)
  %s1211 = scalar_lea.sflag [#allocation3], 5
  %1212 = vsyncmov %s1211
  %s1213 = vpop.sfrf %1212
  %p1214 = scmp.eq.s32.totalorder %s1213, 0
  %p1215 = pneg %p1214
  %1217 = shalt.err (%p1215)
  %s1218 = scalar_lea.sflag [#allocation3], 6
  %1219 = vsyncmov %s1218
  %s1220 = vpop.sfrf %1219
  %p1221 = scmp.eq.s32.totalorder %s1220, 0
  %p1222 = pneg %p1221
  %1224 = shalt.err (%p1222)
  %s1225 = scalar_lea.sflag [#allocation3], 7
  %1226 = vsyncmov %s1225
  %s1227 = vpop.sfrf %1226
  %p1228 = scmp.eq.s32.totalorder %s1227, 0
  %p1229 = pneg %p1228
  %1231 = shalt.err (%p1229)
  %s1232 = scalar_lea.sflag [#allocation3], 8
  %1233 = vsyncmov %s1232
  %s1234 = vpop.sfrf %1233
  %p1235 = scmp.eq.s32.totalorder %s1234, 0
  %p1236 = pneg %p1235
  %1238 = shalt.err (%p1236)

</llo_original>
